<compile_context>
chip_gen: v5e
topology: v5e:2x2
jax: 0.10.0
libtpu: 0.0.40
codegen_flags: <defaults>
</compile_context>

<pallas_src>
import math
from functools import partial

import jax
import jax.numpy as jnp
from jax.experimental import pallas as pl
from jax.experimental.pallas import tpu as pltpu

# ---- small, deterministic config (mirrors the PyTorch module's __init__ fields) ----
B, T = 2, 8          # batch, sequence length (<= n_ctx, n_positions)
V = 64               # config.total_vocab_size
D = 32               # config.n_embd
H = 4                # config.n_head
N_LAYER = 2          # config.n_layer
N_POS = 16           # config.n_positions
EPS = 1e-5           # config.layer_norm_epsilon


# ----------------------------- shared math helpers -----------------------------
def _layernorm(x, g, b, eps):
    mu = jnp.mean(x, axis=-1, keepdims=True)
    var = jnp.mean((x - mu) ** 2, axis=-1, keepdims=True)
    return (x - mu) * jax.lax.rsqrt(var + eps) * g + b


def _gelu_exact(x):
    # F.gelu default (approximate='none'): exact erf-based GELU
    return 0.5 * x * (1.0 + jax.lax.erf(x * (1.0 / math.sqrt(2.0))))


# --------------------------------- fused kernel ----------------------------------
def fused_kernel(x_ref, wv_ref, pos_ref,
                 ln1g_ref, ln1b_ref, wqkv_ref, bqkv_ref, wpr_ref, bpr_ref,
                 ln2g_ref, ln2b_ref, wfc_ref, bfc_ref, wp2_ref, bp2_ref,
                 lnfg_ref, lnfb_ref,
                 o_ref, attn_ref,
                 *, n_layer, n_head, batch, seq, eps):
    # x_ref: (B*T, V)  wv_ref: (V, D)  pos_ref: (B*T, D)
    # stacked per-layer weights: leading axis = layer
    # o_ref: (B*T, D)  attn_ref (scratch): (B, T, D)
    bt, dm = o_ref.shape
    hd = dm // n_head
    inv_scale = 1.0 / math.sqrt(hd)

    # visit multi-hot embedding (single MXU matmul over all B*T rows) + pos embeds
    h = jnp.dot(x_ref[...], wv_ref[...], preferred_element_type=jnp.float32) \
        + pos_ref[...]                                             # (B*T, D)

    # causal additive bias, built once, reused by every layer/head.
    # equivalent to the reference's  w*b - 1e10*(1-b)  (0/1 tril mask).
    row = jax.lax.broadcasted_iota(jnp.int32, (seq, seq), 0)
    col = jax.lax.broadcasted_iota(jnp.int32, (seq, seq), 1)
    mask_bias = jnp.where(row >= col, 0.0, -1e10).astype(jnp.float32)[None]  # (1,T,T)

    for l in range(n_layer):                     # unrolled; weights indexed statically
        # --- ln_1 + causal self-attention (Attention with scale=True) ---
        h1 = _layernorm(h, ln1g_ref[l], ln1b_ref[l], eps)
        qkv = jnp.dot(h1, wqkv_ref[l], preferred_element_type=jnp.float32) + bqkv_ref[l]
        # fold 1/sqrt(hd) into q once (equivalent to scaling every score matrix)
        q = (qkv[:, :dm] * inv_scale).reshape(batch, seq, dm)      # (B, T, D)
        k = qkv[:, dm:2 * dm].reshape(batch, seq, dm)
        v = qkv[:, 2 * dm:].reshape(batch, seq, dm)

        for hh in range(n_head):                          # static head loop
            lo = hh * hd
            qh = q[:, :, lo:lo + hd]                      # (B, T, hd)
            kh = k[:, :, lo:lo + hd]
            vh = v[:, :, lo:lo + hd]
            s = jnp.einsum("bqd,bkd->bqk", qh, kh,
                           preferred_element_type=jnp.float32)
            s = s + mask_bias                             # additive causal bias
            s = s - jnp.max(s, axis=-1, keepdims=True)
            p = jnp.exp(s)
            inv_den = pl.reciprocal(jnp.sum(p, axis=-1, keepdims=True), approx=True)
            p = p * inv_den
            # write PV result straight into the merged-heads scratch (no concat)
            attn_ref[:, :, lo:lo + hd] = jnp.einsum(
                "bqk,bkd->bqd", p, vh, preferred_element_type=jnp.float32)

        a = attn_ref[...].reshape(bt, dm)                 # merge_heads -> (B*T, D)
        a = jnp.dot(a, wpr_ref[l], preferred_element_type=jnp.float32) + bpr_ref[l]
        h = h + a

        # --- ln_2 + MLP (4*D hidden, exact erf GELU) ---
        h2 = _layernorm(h, ln2g_ref[l], ln2b_ref[l], eps)
        m = jnp.dot(h2, wfc_ref[l], preferred_element_type=jnp.float32) + bfc_ref[l]
        m = _gelu_exact(m)
        m = jnp.dot(m, wp2_ref[l], preferred_element_type=jnp.float32) + bp2_ref[l]
        h = h + m

    # --- ln_f ---
    o_ref[...] = _layernorm(h, lnfg_ref[...], lnfb_ref[...], eps)


# ------------------------------- model forward -----------------------------------
def model_forward(input_visits, params):
    # past=None  ->  position_ids = arange(0, T) broadcast over the batch; the
    # positional lookup + batch expansion is host-side glue (pure slicing).
    # TODO(synk): layer_past / `present` KV-cache outputs of Attention are not
    #             implemented (forward is always called with past=None here).
    x2 = input_visits.reshape(B * T, V)
    pos = jnp.broadcast_to(params["pos_table"][:T][None], (B, T, D)).reshape(B * T, D)

    kernel = partial(fused_kernel, n_layer=N_LAYER, n_head=H, batch=B, seq=T, eps=EPS)
    out = pl.pallas_call(
        kernel,
        out_shape=jax.ShapeDtypeStruct((B * T, D), jnp.float32),
        scratch_shapes=[pltpu.VMEM((B, T, D), jnp.float32)],       # merged-heads buf
        compiler_params=pltpu.CompilerParams(vmem_limit_bytes=32 * 1024 * 1024),
    )(x2, params["w_vis"], pos, *params["block"], params["lnf_g"], params["lnf_b"])
    return out.reshape(B, T, D)


# --------------------------- pure-JAX reference (validation) ----------------------
def reference_forward(x, params):
    p = params
    h = jnp.einsum("btv,vd->btd", x, p["w_vis"]) + p["pos_table"][:T][None]
    mask = jnp.tril(jnp.ones((T, T), jnp.float32))
    for l in range(N_LAYER):
        (ln1g, ln1b, wqkv, bqkv, wpr, bpr,
         ln2g, ln2b, wfc, bfc, wp2, bp2) = [w[l] for w in p["block"]]
        h1 = _layernorm(h, ln1g, ln1b, EPS)
        qkv = h1 @ wqkv + bqkv
        q, k, v = jnp.split(qkv, 3, axis=-1)
        split = lambda z: z.reshape(B, T, H, D // H).transpose(0, 2, 1, 3)
        qh, kh, vh = split(q), split(k), split(v)
        w = jnp.einsum("bhtd,bhsd->bhts", qh, kh) / math.sqrt(D // H)
        w = w * mask - 1e10 * (1.0 - mask)
        w = jax.nn.softmax(w, axis=-1)
        a = jnp.einsum("bhts,bhsd->bhtd", w, vh).transpose(0, 2, 1, 3).reshape(B, T, D)
        a = a @ wpr + bpr
        h = h + a
        h2 = _layernorm(h, ln2g, ln2b, EPS)
        m = _gelu_exact(h2 @ wfc + bfc) @ wp2 + bp2
        h = h + m
    return _layernorm(h, p["lnf_g"], p["lnf_b"], EPS)


# ------------------------------------ params ---------------------------------------
def make_params(key):
    keys = jax.random.split(key, 4 + 12 * N_LAYER)
    n = lambda k, shp, s=0.02: (s * jax.random.normal(k, shp)).astype(jnp.float32)

    def layer_params(ks):
        return (
            (1.0 + n(ks[0], (1, D), 0.01)),          # ln_1 weight
            n(ks[1], (1, D), 0.01),                  # ln_1 bias
            n(ks[2], (D, 3 * D)),                    # c_attn weight^T
            n(ks[3], (1, 3 * D), 0.01),              # c_attn bias
            n(ks[4], (D, D)),                        # c_proj weight^T
            n(ks[5], (1, D), 0.01),                  # c_proj bias
            (1.0 + n(ks[6], (1, D), 0.01)),          # ln_2 weight
            n(ks[7], (1, D), 0.01),                  # ln_2 bias
            n(ks[8], (D, 4 * D)),                    # mlp c_fc weight^T
            n(ks[9], (1, 4 * D), 0.01),              # mlp c_fc bias
            n(ks[10], (4 * D, D)),                   # mlp c_proj weight^T
            n(ks[11], (1, D), 0.01),                 # mlp c_proj bias
        )

    per_layer = [layer_params(keys[4 + 12 * l: 4 + 12 * (l + 1)]) for l in range(N_LAYER)]
    # stack each weight along a leading layer axis -> one HBM->VMEM DMA per tensor
    block = tuple(jnp.stack([per_layer[l][i] for l in range(N_LAYER)], axis=0)
                  for i in range(12))
    return {
        "w_vis": n(keys[0], (V, D)),                 # vis_embed_mat weight^T (no bias)
        "pos_table": n(keys[1], (N_POS, D)),         # pos_embed_mat table
        "block": block,                              # per-layer weights, stacked
        "lnf_g": (1.0 + n(keys[2], (1, D), 0.01)),
        "lnf_b": n(keys[3], (1, D), 0.01),
    }


# ------------------------------------ main ----------------------------------------
if __name__ == "__main__":
    key = jax.random.PRNGKey(0)
    k_in, k_p = jax.random.split(key)
    # multi-hot visit codes as float32
    input_visits = jax.random.bernoulli(k_in, 0.1, (B, T, V)).astype(jnp.float32)
    params = make_params(k_p)

    out = jax.block_until_ready(model_forward(input_visits, params))
    ref = jax.block_until_ready(reference_forward(input_visits, params))

    assert out.shape == (B, T, D) and out.dtype == jnp.float32
    max_err = jnp.max(jnp.abs(out - ref))
    # tolerance covers MXU f32 accumulation + the EUP approx reciprocal in softmax
    assert jnp.allclose(out, ref, atol=2e-3, rtol=2e-3), f"max abs err {max_err}"
    print("KERNEL_OK")
</pallas_src>

<mosaic_0001>
module attributes {stable_mosaic.version = 11 : i64} {
  func.func @fused_kernel(%arg0: memref<16x64xf32, #tpu.memory_space<vmem>>, %arg1: memref<64x32xf32, #tpu.memory_space<vmem>>, %arg2: memref<16x32xf32, #tpu.memory_space<vmem>>, %arg3: memref<2x1x32xf32, #tpu.memory_space<vmem>>, %arg4: memref<2x1x32xf32, #tpu.memory_space<vmem>>, %arg5: memref<2x32x96xf32, #tpu.memory_space<vmem>>, %arg6: memref<2x1x96xf32, #tpu.memory_space<vmem>>, %arg7: memref<2x32x32xf32, #tpu.memory_space<vmem>>, %arg8: memref<2x1x32xf32, #tpu.memory_space<vmem>>, %arg9: memref<2x1x32xf32, #tpu.memory_space<vmem>>, %arg10: memref<2x1x32xf32, #tpu.memory_space<vmem>>, %arg11: memref<2x32x128xf32, #tpu.memory_space<vmem>>, %arg12: memref<2x1x128xf32, #tpu.memory_space<vmem>>, %arg13: memref<2x128x32xf32, #tpu.memory_space<vmem>>, %arg14: memref<2x1x32xf32, #tpu.memory_space<vmem>>, %arg15: memref<1x32xf32, #tpu.memory_space<vmem>>, %arg16: memref<1x32xf32, #tpu.memory_space<vmem>>, %arg17: memref<16x32xf32, #tpu.memory_space<vmem>>, %arg18: memref<2x8x32xf32, #tpu.memory_space<vmem>>) attributes {dimension_semantics = [], scalar_prefetch = 0 : i64, scratch_operands = 1 : i64, tpu.core_type = #tpu.core_type<tc>} {
    %c0 = arith.constant 0 : index
    %c0_0 = arith.constant 0 : index
    %0 = vector.load %arg0[%c0, %c0_0] : memref<16x64xf32, #tpu.memory_space<vmem>>, vector<16x64xf32>
    %c0_1 = arith.constant 0 : index
    %c0_2 = arith.constant 0 : index
    %1 = vector.load %arg1[%c0_1, %c0_2] : memref<64x32xf32, #tpu.memory_space<vmem>>, vector<64x32xf32>
    %cst = arith.constant dense<0.000000e+00> : vector<16x32xf32>
    %2 = tpu.matmul %0, %1, %cst {dimension_numbers = #tpu.dot_dimension_numbers<[1], [0], [0], [1], [0, 0, 1, 1], [], []>} : vector<16x64xf32>, vector<64x32xf32>, vector<16x32xf32> -> vector<16x32xf32>
    %c0_3 = arith.constant 0 : index
    %c0_4 = arith.constant 0 : index
    %3 = vector.load %arg2[%c0_3, %c0_4] : memref<16x32xf32, #tpu.memory_space<vmem>>, vector<16x32xf32>
    %4 = arith.addf %2, %3 : vector<16x32xf32>
    %5 = tpu.iota {dimensions = array<i32: 0>} : vector<8x8xi32>
    %6 = tpu.iota {dimensions = array<i32: 1>} : vector<8x8xi32>
    %7 = arith.cmpi sge, %5, %6 : vector<8x8xi32>
    %cst_5 = arith.constant 0.000000e+00 : f32
    %cst_6 = arith.constant -1.000000e+10 : f32
    %8 = vector.broadcast %cst_5 : f32 to vector<8x8xf32>
    %9 = vector.broadcast %cst_6 : f32 to vector<8x8xf32>
    %10 = arith.select %7, %8, %9 : vector<8x8xi1>, vector<8x8xf32>
    %11 = vector.shape_cast %10 : vector<8x8xf32> to vector<1x8x8xf32>
    %c0_7 = arith.constant 0 : index
    %c0_8 = arith.constant 0 : index
    %c0_9 = arith.constant 0 : index
    %12 = vector.load %arg3[%c0_7, %c0_8, %c0_9] : memref<2x1x32xf32, #tpu.memory_space<vmem>>, vector<1x1x32xf32>
    %13 = vector.shape_cast %12 : vector<1x1x32xf32> to vector<1x32xf32>
    %c0_10 = arith.constant 0 : index
    %c0_11 = arith.constant 0 : index
    %c0_12 = arith.constant 0 : index
    %14 = vector.load %arg4[%c0_10, %c0_11, %c0_12] : memref<2x1x32xf32, #tpu.memory_space<vmem>>, vector<1x1x32xf32>
    %15 = vector.shape_cast %14 : vector<1x1x32xf32> to vector<1x32xf32>
    %cst_13 = arith.constant dense<0.000000e+00> : vector<16xf32>
    %16 = vector.multi_reduction <add>, %4, %cst_13 [1] : vector<16x32xf32> to vector<16xf32>
    %17 = vector.shape_cast %16 : vector<16xf32> to vector<16x1xf32>
    %cst_14 = arith.constant 3.200000e+01 : f32
    %18 = vector.broadcast %cst_14 : f32 to vector<16x1xf32>
    %19 = arith.divf %17, %18 : vector<16x1xf32>
    %20 = vector.broadcast %19 : vector<16x1xf32> to vector<16x32xf32>
    %21 = arith.subf %4, %20 : vector<16x32xf32>
    %22 = arith.mulf %21, %21 : vector<16x32xf32>
    %cst_15 = arith.constant dense<0.000000e+00> : vector<16xf32>
    %23 = vector.multi_reduction <add>, %22, %cst_15 [1] : vector<16x32xf32> to vector<16xf32>
    %24 = vector.shape_cast %23 : vector<16xf32> to vector<16x1xf32>
    %cst_16 = arith.constant 3.200000e+01 : f32
    %25 = vector.broadcast %cst_16 : f32 to vector<16x1xf32>
    %26 = arith.divf %24, %25 : vector<16x1xf32>
    %27 = vector.broadcast %19 : vector<16x1xf32> to vector<16x32xf32>
    %28 = arith.subf %4, %27 : vector<16x32xf32>
    %cst_17 = arith.constant 9.99999974E-6 : f32
    %29 = vector.broadcast %cst_17 : f32 to vector<16x1xf32>
    %30 = arith.addf %26, %29 : vector<16x1xf32>
    %31 = math.rsqrt %30 : vector<16x1xf32>
    %32 = vector.broadcast %31 : vector<16x1xf32> to vector<16x32xf32>
    %33 = arith.mulf %28, %32 : vector<16x32xf32>
    %34 = vector.broadcast %13 : vector<1x32xf32> to vector<16x32xf32>
    %35 = arith.mulf %33, %34 : vector<16x32xf32>
    %36 = vector.broadcast %15 : vector<1x32xf32> to vector<16x32xf32>
    %37 = arith.addf %35, %36 : vector<16x32xf32>
    %c0_18 = arith.constant 0 : index
    %c0_19 = arith.constant 0 : index
    %c0_20 = arith.constant 0 : index
    %38 = vector.load %arg5[%c0_18, %c0_19, %c0_20] : memref<2x32x96xf32, #tpu.memory_space<vmem>>, vector<1x32x96xf32>
    %39 = vector.shape_cast %38 : vector<1x32x96xf32> to vector<32x96xf32>
    %cst_21 = arith.constant dense<0.000000e+00> : vector<16x96xf32>
    %40 = tpu.matmul %37, %39, %cst_21 {dimension_numbers = #tpu.dot_dimension_numbers<[1], [0], [0], [1], [0, 0, 1, 1], [], []>} : vector<16x32xf32>, vector<32x96xf32>, vector<16x96xf32> -> vector<16x96xf32>
    %c0_22 = arith.constant 0 : index
    %c0_23 = arith.constant 0 : index
    %c0_24 = arith.constant 0 : index
    %41 = vector.load %arg6[%c0_22, %c0_23, %c0_24] : memref<2x1x96xf32, #tpu.memory_space<vmem>>, vector<1x1x96xf32>
    %42 = vector.shape_cast %41 : vector<1x1x96xf32> to vector<1x96xf32>
    %43 = vector.broadcast %42 : vector<1x96xf32> to vector<16x96xf32>
    %44 = arith.addf %40, %43 : vector<16x96xf32>
    %45 = vector.extract_strided_slice %44 {offsets = [0, 0], sizes = [16, 32], strides = [1, 1]} : vector<16x96xf32> to vector<16x32xf32>
    %cst_25 = arith.constant 0.353553385 : f32
    %46 = vector.broadcast %cst_25 : f32 to vector<16x32xf32>
    %47 = arith.mulf %45, %46 : vector<16x32xf32>
    %48 = vector.shape_cast %47 : vector<16x32xf32> to vector<2x8x32xf32>
    %49 = vector.extract_strided_slice %44 {offsets = [0, 32], sizes = [16, 32], strides = [1, 1]} : vector<16x96xf32> to vector<16x32xf32>
    %50 = vector.shape_cast %49 : vector<16x32xf32> to vector<2x8x32xf32>
    %51 = vector.extract_strided_slice %44 {offsets = [0, 64], sizes = [16, 32], strides = [1, 1]} : vector<16x96xf32> to vector<16x32xf32>
    %52 = vector.shape_cast %51 : vector<16x32xf32> to vector<2x8x32xf32>
    %53 = vector.extract_strided_slice %48 {offsets = [0, 0, 0], sizes = [2, 8, 8], strides = [1, 1, 1]} : vector<2x8x32xf32> to vector<2x8x8xf32>
    %54 = vector.extract_strided_slice %50 {offsets = [0, 0, 0], sizes = [2, 8, 8], strides = [1, 1, 1]} : vector<2x8x32xf32> to vector<2x8x8xf32>
    %55 = vector.extract_strided_slice %52 {offsets = [0, 0, 0], sizes = [2, 8, 8], strides = [1, 1, 1]} : vector<2x8x32xf32> to vector<2x8x8xf32>
    "tpu.trace_start"() <{level = 10 : i32, message = "bqd,bkd->bqk"}> : () -> ()
    %cst_26 = arith.constant dense<0.000000e+00> : vector<2x8x8xf32>
    %56 = tpu.matmul %53, %54, %cst_26 {dimension_numbers = #tpu.dot_dimension_numbers<[2], [2], [1], [1], [0, 0, 0, 1, 1, 1], [0], [0]>} : vector<2x8x8xf32>, vector<2x8x8xf32>, vector<2x8x8xf32> -> vector<2x8x8xf32>
    "tpu.trace_stop"() : () -> ()
    %57 = vector.broadcast %11 : vector<1x8x8xf32> to vector<2x8x8xf32>
    %58 = arith.addf %56, %57 : vector<2x8x8xf32>
    %cst_27 = arith.constant dense<0xFF800000> : vector<2x8xf32>
    %59 = vector.multi_reduction <maximumf>, %58, %cst_27 [2] : vector<2x8x8xf32> to vector<2x8xf32>
    %60 = vector.shape_cast %59 : vector<2x8xf32> to vector<2x8x1xf32>
    %61 = vector.broadcast %60 : vector<2x8x1xf32> to vector<2x8x8xf32>
    %62 = arith.subf %58, %61 : vector<2x8x8xf32>
    %63 = math.exp %62 : vector<2x8x8xf32>
    %cst_28 = arith.constant dense<0.000000e+00> : vector<2x8xf32>
    %64 = vector.multi_reduction <add>, %63, %cst_28 [2] : vector<2x8x8xf32> to vector<2x8xf32>
    %65 = vector.shape_cast %64 : vector<2x8xf32> to vector<2x8x1xf32>
    %66 = tpu.reciprocal %65 {approx = true} : vector<2x8x1xf32> -> vector<2x8x1xf32>
    %67 = vector.broadcast %66 : vector<2x8x1xf32> to vector<2x8x8xf32>
    %68 = arith.mulf %63, %67 : vector<2x8x8xf32>
    "tpu.trace_start"() <{level = 10 : i32, message = "bqk,bkd->bqd"}> : () -> ()
    %cst_29 = arith.constant dense<0.000000e+00> : vector<2x8x8xf32>
    %69 = tpu.matmul %68, %55, %cst_29 {dimension_numbers = #tpu.dot_dimension_numbers<[2], [1], [1], [2], [0, 0, 0, 1, 1, 2], [0], [0]>} : vector<2x8x8xf32>, vector<2x8x8xf32>, vector<2x8x8xf32> -> vector<2x8x8xf32>
    "tpu.trace_stop"() : () -> ()
    %c0_30 = arith.constant 0 : index
    %c0_31 = arith.constant 0 : index
    %c0_32 = arith.constant 0 : index
    %70 = vector.load %arg18[%c0_30, %c0_31, %c0_32] : memref<2x8x32xf32, #tpu.memory_space<vmem>>, vector<2x8x8xf32>
    tpu.vector_store %arg18[%c0_30, %c0_31, %c0_32], %69 {strides = array<i32>} : memref<2x8x32xf32, #tpu.memory_space<vmem>>, vector<2x8x8xf32>,
    %71 = vector.extract_strided_slice %48 {offsets = [0, 0, 8], sizes = [2, 8, 8], strides = [1, 1, 1]} : vector<2x8x32xf32> to vector<2x8x8xf32>
    %72 = vector.extract_strided_slice %50 {offsets = [0, 0, 8], sizes = [2, 8, 8], strides = [1, 1, 1]} : vector<2x8x32xf32> to vector<2x8x8xf32>
    %73 = vector.extract_strided_slice %52 {offsets = [0, 0, 8], sizes = [2, 8, 8], strides = [1, 1, 1]} : vector<2x8x32xf32> to vector<2x8x8xf32>
    "tpu.trace_start"() <{level = 10 : i32, message = "bqd,bkd->bqk"}> : () -> ()
    %cst_33 = arith.constant dense<0.000000e+00> : vector<2x8x8xf32>
    %74 = tpu.matmul %71, %72, %cst_33 {dimension_numbers = #tpu.dot_dimension_numbers<[2], [2], [1], [1], [0, 0, 0, 1, 1, 1], [0], [0]>} : vector<2x8x8xf32>, vector<2x8x8xf32>, vector<2x8x8xf32> -> vector<2x8x8xf32>
    "tpu.trace_stop"() : () -> ()
    %75 = vector.broadcast %11 : vector<1x8x8xf32> to vector<2x8x8xf32>
    %76 = arith.addf %74, %75 : vector<2x8x8xf32>
    %cst_34 = arith.constant dense<0xFF800000> : vector<2x8xf32>
    %77 = vector.multi_reduction <maximumf>, %76, %cst_34 [2] : vector<2x8x8xf32> to vector<2x8xf32>
    %78 = vector.shape_cast %77 : vector<2x8xf32> to vector<2x8x1xf32>
    %79 = vector.broadcast %78 : vector<2x8x1xf32> to vector<2x8x8xf32>
    %80 = arith.subf %76, %79 : vector<2x8x8xf32>
    %81 = math.exp %80 : vector<2x8x8xf32>
    %cst_35 = arith.constant dense<0.000000e+00> : vector<2x8xf32>
    %82 = vector.multi_reduction <add>, %81, %cst_35 [2] : vector<2x8x8xf32> to vector<2x8xf32>
    %83 = vector.shape_cast %82 : vector<2x8xf32> to vector<2x8x1xf32>
    %84 = tpu.reciprocal %83 {approx = true} : vector<2x8x1xf32> -> vector<2x8x1xf32>
    %85 = vector.broadcast %84 : vector<2x8x1xf32> to vector<2x8x8xf32>
    %86 = arith.mulf %81, %85 : vector<2x8x8xf32>
    "tpu.trace_start"() <{level = 10 : i32, message = "bqk,bkd->bqd"}> : () -> ()
    %cst_36 = arith.constant dense<0.000000e+00> : vector<2x8x8xf32>
    %87 = tpu.matmul %86, %73, %cst_36 {dimension_numbers = #tpu.dot_dimension_numbers<[2], [1], [1], [2], [0, 0, 0, 1, 1, 2], [0], [0]>} : vector<2x8x8xf32>, vector<2x8x8xf32>, vector<2x8x8xf32> -> vector<2x8x8xf32>
    "tpu.trace_stop"() : () -> ()
    %c0_37 = arith.constant 0 : index
    %c0_38 = arith.constant 0 : index
    %c8 = arith.constant 8 : index
    %88 = vector.load %arg18[%c0_37, %c0_38, %c8] : memref<2x8x32xf32, #tpu.memory_space<vmem>>, vector<2x8x8xf32>
    tpu.vector_store %arg18[%c0_37, %c0_38, %c8], %87 {strides = array<i32>} : memref<2x8x32xf32, #tpu.memory_space<vmem>>, vector<2x8x8xf32>,
    %89 = vector.extract_strided_slice %48 {offsets = [0, 0, 16], sizes = [2, 8, 8], strides = [1, 1, 1]} : vector<2x8x32xf32> to vector<2x8x8xf32>
    %90 = vector.extract_strided_slice %50 {offsets = [0, 0, 16], sizes = [2, 8, 8], strides = [1, 1, 1]} : vector<2x8x32xf32> to vector<2x8x8xf32>
    %91 = vector.extract_strided_slice %52 {offsets = [0, 0, 16], sizes = [2, 8, 8], strides = [1, 1, 1]} : vector<2x8x32xf32> to vector<2x8x8xf32>
    "tpu.trace_start"() <{level = 10 : i32, message = "bqd,bkd->bqk"}> : () -> ()
    %cst_39 = arith.constant dense<0.000000e+00> : vector<2x8x8xf32>
    %92 = tpu.matmul %89, %90, %cst_39 {dimension_numbers = #tpu.dot_dimension_numbers<[2], [2], [1], [1], [0, 0, 0, 1, 1, 1], [0], [0]>} : vector<2x8x8xf32>, vector<2x8x8xf32>, vector<2x8x8xf32> -> vector<2x8x8xf32>
    "tpu.trace_stop"() : () -> ()
    %93 = vector.broadcast %11 : vector<1x8x8xf32> to vector<2x8x8xf32>
    %94 = arith.addf %92, %93 : vector<2x8x8xf32>
    %cst_40 = arith.constant dense<0xFF800000> : vector<2x8xf32>
    %95 = vector.multi_reduction <maximumf>, %94, %cst_40 [2] : vector<2x8x8xf32> to vector<2x8xf32>
    %96 = vector.shape_cast %95 : vector<2x8xf32> to vector<2x8x1xf32>
    %97 = vector.broadcast %96 : vector<2x8x1xf32> to vector<2x8x8xf32>
    %98 = arith.subf %94, %97 : vector<2x8x8xf32>
    %99 = math.exp %98 : vector<2x8x8xf32>
    %cst_41 = arith.constant dense<0.000000e+00> : vector<2x8xf32>
    %100 = vector.multi_reduction <add>, %99, %cst_41 [2] : vector<2x8x8xf32> to vector<2x8xf32>
    %101 = vector.shape_cast %100 : vector<2x8xf32> to vector<2x8x1xf32>
    %102 = tpu.reciprocal %101 {approx = true} : vector<2x8x1xf32> -> vector<2x8x1xf32>
    %103 = vector.broadcast %102 : vector<2x8x1xf32> to vector<2x8x8xf32>
    %104 = arith.mulf %99, %103 : vector<2x8x8xf32>
    "tpu.trace_start"() <{level = 10 : i32, message = "bqk,bkd->bqd"}> : () -> ()
    %cst_42 = arith.constant dense<0.000000e+00> : vector<2x8x8xf32>
    %105 = tpu.matmul %104, %91, %cst_42 {dimension_numbers = #tpu.dot_dimension_numbers<[2], [1], [1], [2], [0, 0, 0, 1, 1, 2], [0], [0]>} : vector<2x8x8xf32>, vector<2x8x8xf32>, vector<2x8x8xf32> -> vector<2x8x8xf32>
    "tpu.trace_stop"() : () -> ()
    %c0_43 = arith.constant 0 : index
    %c0_44 = arith.constant 0 : index
    %c16 = arith.constant 16 : index
    %106 = vector.load %arg18[%c0_43, %c0_44, %c16] : memref<2x8x32xf32, #tpu.memory_space<vmem>>, vector<2x8x8xf32>
    tpu.vector_store %arg18[%c0_43, %c0_44, %c16], %105 {strides = array<i32>} : memref<2x8x32xf32, #tpu.memory_space<vmem>>, vector<2x8x8xf32>,
    %107 = vector.extract_strided_slice %48 {offsets = [0, 0, 24], sizes = [2, 8, 8], strides = [1, 1, 1]} : vector<2x8x32xf32> to vector<2x8x8xf32>
    %108 = vector.extract_strided_slice %50 {offsets = [0, 0, 24], sizes = [2, 8, 8], strides = [1, 1, 1]} : vector<2x8x32xf32> to vector<2x8x8xf32>
    %109 = vector.extract_strided_slice %52 {offsets = [0, 0, 24], sizes = [2, 8, 8], strides = [1, 1, 1]} : vector<2x8x32xf32> to vector<2x8x8xf32>
    "tpu.trace_start"() <{level = 10 : i32, message = "bqd,bkd->bqk"}> : () -> ()
    %cst_45 = arith.constant dense<0.000000e+00> : vector<2x8x8xf32>
    %110 = tpu.matmul %107, %108, %cst_45 {dimension_numbers = #tpu.dot_dimension_numbers<[2], [2], [1], [1], [0, 0, 0, 1, 1, 1], [0], [0]>} : vector<2x8x8xf32>, vector<2x8x8xf32>, vector<2x8x8xf32> -> vector<2x8x8xf32>
    "tpu.trace_stop"() : () -> ()
    %111 = vector.broadcast %11 : vector<1x8x8xf32> to vector<2x8x8xf32>
    %112 = arith.addf %110, %111 : vector<2x8x8xf32>
    %cst_46 = arith.constant dense<0xFF800000> : vector<2x8xf32>
    %113 = vector.multi_reduction <maximumf>, %112, %cst_46 [2] : vector<2x8x8xf32> to vector<2x8xf32>
    %114 = vector.shape_cast %113 : vector<2x8xf32> to vector<2x8x1xf32>
    %115 = vector.broadcast %114 : vector<2x8x1xf32> to vector<2x8x8xf32>
    %116 = arith.subf %112, %115 : vector<2x8x8xf32>
    %117 = math.exp %116 : vector<2x8x8xf32>
    %cst_47 = arith.constant dense<0.000000e+00> : vector<2x8xf32>
    %118 = vector.multi_reduction <add>, %117, %cst_47 [2] : vector<2x8x8xf32> to vector<2x8xf32>
    %119 = vector.shape_cast %118 : vector<2x8xf32> to vector<2x8x1xf32>
    %120 = tpu.reciprocal %119 {approx = true} : vector<2x8x1xf32> -> vector<2x8x1xf32>
    %121 = vector.broadcast %120 : vector<2x8x1xf32> to vector<2x8x8xf32>
    %122 = arith.mulf %117, %121 : vector<2x8x8xf32>
    "tpu.trace_start"() <{level = 10 : i32, message = "bqk,bkd->bqd"}> : () -> ()
    %cst_48 = arith.constant dense<0.000000e+00> : vector<2x8x8xf32>
    %123 = tpu.matmul %122, %109, %cst_48 {dimension_numbers = #tpu.dot_dimension_numbers<[2], [1], [1], [2], [0, 0, 0, 1, 1, 2], [0], [0]>} : vector<2x8x8xf32>, vector<2x8x8xf32>, vector<2x8x8xf32> -> vector<2x8x8xf32>
    "tpu.trace_stop"() : () -> ()
    %c0_49 = arith.constant 0 : index
    %c0_50 = arith.constant 0 : index
    %c24 = arith.constant 24 : index
    %124 = vector.load %arg18[%c0_49, %c0_50, %c24] : memref<2x8x32xf32, #tpu.memory_space<vmem>>, vector<2x8x8xf32>
    tpu.vector_store %arg18[%c0_49, %c0_50, %c24], %123 {strides = array<i32>} : memref<2x8x32xf32, #tpu.memory_space<vmem>>, vector<2x8x8xf32>,
    %c0_51 = arith.constant 0 : index
    %c0_52 = arith.constant 0 : index
    %c0_53 = arith.constant 0 : index
    %125 = vector.load %arg18[%c0_51, %c0_52, %c0_53] : memref<2x8x32xf32, #tpu.memory_space<vmem>>, vector<2x8x32xf32>
    %126 = vector.shape_cast %125 : vector<2x8x32xf32> to vector<16x32xf32>
    %c0_54 = arith.constant 0 : index
    %c0_55 = arith.constant 0 : index
    %c0_56 = arith.constant 0 : index
    %127 = vector.load %arg7[%c0_54, %c0_55, %c0_56] : memref<2x32x32xf32, #tpu.memory_space<vmem>>, vector<1x32x32xf32>
    %128 = vector.shape_cast %127 : vector<1x32x32xf32> to vector<32x32xf32>
    %cst_57 = arith.constant dense<0.000000e+00> : vector<16x32xf32>
    %129 = tpu.matmul %126, %128, %cst_57 {dimension_numbers = #tpu.dot_dimension_numbers<[1], [0], [0], [1], [0, 0, 1, 1], [], []>} : vector<16x32xf32>, vector<32x32xf32>, vector<16x32xf32> -> vector<16x32xf32>
    %c0_58 = arith.constant 0 : index
    %c0_59 = arith.constant 0 : index
    %c0_60 = arith.constant 0 : index
    %130 = vector.load %arg8[%c0_58, %c0_59, %c0_60] : memref<2x1x32xf32, #tpu.memory_space<vmem>>, vector<1x1x32xf32>
    %131 = vector.shape_cast %130 : vector<1x1x32xf32> to vector<1x32xf32>
    %132 = vector.broadcast %131 : vector<1x32xf32> to vector<16x32xf32>
    %133 = arith.addf %129, %132 : vector<16x32xf32>
    %134 = arith.addf %4, %133 : vector<16x32xf32>
    %c0_61 = arith.constant 0 : index
    %c0_62 = arith.constant 0 : index
    %c0_63 = arith.constant 0 : index
    %135 = vector.load %arg9[%c0_61, %c0_62, %c0_63] : memref<2x1x32xf32, #tpu.memory_space<vmem>>, vector<1x1x32xf32>
    %136 = vector.shape_cast %135 : vector<1x1x32xf32> to vector<1x32xf32>
    %c0_64 = arith.constant 0 : index
    %c0_65 = arith.constant 0 : index
    %c0_66 = arith.constant 0 : index
    %137 = vector.load %arg10[%c0_64, %c0_65, %c0_66] : memref<2x1x32xf32, #tpu.memory_space<vmem>>, vector<1x1x32xf32>
    %138 = vector.shape_cast %137 : vector<1x1x32xf32> to vector<1x32xf32>
    %cst_67 = arith.constant dense<0.000000e+00> : vector<16xf32>
    %139 = vector.multi_reduction <add>, %134, %cst_67 [1] : vector<16x32xf32> to vector<16xf32>
    %140 = vector.shape_cast %139 : vector<16xf32> to vector<16x1xf32>
    %cst_68 = arith.constant 3.200000e+01 : f32
    %141 = vector.broadcast %cst_68 : f32 to vector<16x1xf32>
    %142 = arith.divf %140, %141 : vector<16x1xf32>
    %143 = vector.broadcast %142 : vector<16x1xf32> to vector<16x32xf32>
    %144 = arith.subf %134, %143 : vector<16x32xf32>
    %145 = arith.mulf %144, %144 : vector<16x32xf32>
    %cst_69 = arith.constant dense<0.000000e+00> : vector<16xf32>
    %146 = vector.multi_reduction <add>, %145, %cst_69 [1] : vector<16x32xf32> to vector<16xf32>
    %147 = vector.shape_cast %146 : vector<16xf32> to vector<16x1xf32>
    %cst_70 = arith.constant 3.200000e+01 : f32
    %148 = vector.broadcast %cst_70 : f32 to vector<16x1xf32>
    %149 = arith.divf %147, %148 : vector<16x1xf32>
    %150 = vector.broadcast %142 : vector<16x1xf32> to vector<16x32xf32>
    %151 = arith.subf %134, %150 : vector<16x32xf32>
    %cst_71 = arith.constant 9.99999974E-6 : f32
    %152 = vector.broadcast %cst_71 : f32 to vector<16x1xf32>
    %153 = arith.addf %149, %152 : vector<16x1xf32>
    %154 = math.rsqrt %153 : vector<16x1xf32>
    %155 = vector.broadcast %154 : vector<16x1xf32> to vector<16x32xf32>
    %156 = arith.mulf %151, %155 : vector<16x32xf32>
    %157 = vector.broadcast %136 : vector<1x32xf32> to vector<16x32xf32>
    %158 = arith.mulf %156, %157 : vector<16x32xf32>
    %159 = vector.broadcast %138 : vector<1x32xf32> to vector<16x32xf32>
    %160 = arith.addf %158, %159 : vector<16x32xf32>
    %c0_72 = arith.constant 0 : index
    %c0_73 = arith.constant 0 : index
    %c0_74 = arith.constant 0 : index
    %161 = vector.load %arg11[%c0_72, %c0_73, %c0_74] : memref<2x32x128xf32, #tpu.memory_space<vmem>>, vector<1x32x128xf32>
    %162 = vector.shape_cast %161 : vector<1x32x128xf32> to vector<32x128xf32>
    %cst_75 = arith.constant dense<0.000000e+00> : vector<16x128xf32>
    %163 = tpu.matmul %160, %162, %cst_75 {dimension_numbers = #tpu.dot_dimension_numbers<[1], [0], [0], [1], [0, 0, 1, 1], [], []>} : vector<16x32xf32>, vector<32x128xf32>, vector<16x128xf32> -> vector<16x128xf32>
    %c0_76 = arith.constant 0 : index
    %c0_77 = arith.constant 0 : index
    %c0_78 = arith.constant 0 : index
    %164 = vector.load %arg12[%c0_76, %c0_77, %c0_78] : memref<2x1x128xf32, #tpu.memory_space<vmem>>, vector<1x1x128xf32>
    %165 = vector.shape_cast %164 : vector<1x1x128xf32> to vector<1x128xf32>
    %166 = vector.broadcast %165 : vector<1x128xf32> to vector<16x128xf32>
    %167 = arith.addf %163, %166 : vector<16x128xf32>
    %cst_79 = arith.constant 5.000000e-01 : f32
    %168 = vector.broadcast %cst_79 : f32 to vector<16x128xf32>
    %169 = arith.mulf %168, %167 : vector<16x128xf32>
    %cst_80 = arith.constant 0.707106769 : f32
    %170 = vector.broadcast %cst_80 : f32 to vector<16x128xf32>
    %171 = arith.mulf %167, %170 : vector<16x128xf32>
    %172 = math.erf %171 : vector<16x128xf32>
    %cst_81 = arith.constant 1.000000e+00 : f32
    %173 = vector.broadcast %cst_81 : f32 to vector<16x128xf32>
    %174 = arith.addf %173, %172 : vector<16x128xf32>
    %175 = arith.mulf %169, %174 : vector<16x128xf32>
    %c0_82 = arith.constant 0 : index
    %c0_83 = arith.constant 0 : index
    %c0_84 = arith.constant 0 : index
    %176 = vector.load %arg13[%c0_82, %c0_83, %c0_84] : memref<2x128x32xf32, #tpu.memory_space<vmem>>, vector<1x128x32xf32>
    %177 = vector.shape_cast %176 : vector<1x128x32xf32> to vector<128x32xf32>
    %cst_85 = arith.constant dense<0.000000e+00> : vector<16x32xf32>
    %178 = tpu.matmul %175, %177, %cst_85 {dimension_numbers = #tpu.dot_dimension_numbers<[1], [0], [0], [1], [0, 0, 1, 1], [], []>} : vector<16x128xf32>, vector<128x32xf32>, vector<16x32xf32> -> vector<16x32xf32>
    %c0_86 = arith.constant 0 : index
    %c0_87 = arith.constant 0 : index
    %c0_88 = arith.constant 0 : index
    %179 = vector.load %arg14[%c0_86, %c0_87, %c0_88] : memref<2x1x32xf32, #tpu.memory_space<vmem>>, vector<1x1x32xf32>
    %180 = vector.shape_cast %179 : vector<1x1x32xf32> to vector<1x32xf32>
    %181 = vector.broadcast %180 : vector<1x32xf32> to vector<16x32xf32>
    %182 = arith.addf %178, %181 : vector<16x32xf32>
    %183 = arith.addf %134, %182 : vector<16x32xf32>
    %c1 = arith.constant 1 : index
    %c0_89 = arith.constant 0 : index
    %c0_90 = arith.constant 0 : index
    %184 = vector.load %arg3[%c1, %c0_89, %c0_90] : memref<2x1x32xf32, #tpu.memory_space<vmem>>, vector<1x1x32xf32>
    %185 = vector.shape_cast %184 : vector<1x1x32xf32> to vector<1x32xf32>
    %c1_91 = arith.constant 1 : index
    %c0_92 = arith.constant 0 : index
    %c0_93 = arith.constant 0 : index
    %186 = vector.load %arg4[%c1_91, %c0_92, %c0_93] : memref<2x1x32xf32, #tpu.memory_space<vmem>>, vector<1x1x32xf32>
    %187 = vector.shape_cast %186 : vector<1x1x32xf32> to vector<1x32xf32>
    %cst_94 = arith.constant dense<0.000000e+00> : vector<16xf32>
    %188 = vector.multi_reduction <add>, %183, %cst_94 [1] : vector<16x32xf32> to vector<16xf32>
    %189 = vector.shape_cast %188 : vector<16xf32> to vector<16x1xf32>
    %cst_95 = arith.constant 3.200000e+01 : f32
    %190 = vector.broadcast %cst_95 : f32 to vector<16x1xf32>
    %191 = arith.divf %189, %190 : vector<16x1xf32>
    %192 = vector.broadcast %191 : vector<16x1xf32> to vector<16x32xf32>
    %193 = arith.subf %183, %192 : vector<16x32xf32>
    %194 = arith.mulf %193, %193 : vector<16x32xf32>
    %cst_96 = arith.constant dense<0.000000e+00> : vector<16xf32>
    %195 = vector.multi_reduction <add>, %194, %cst_96 [1] : vector<16x32xf32> to vector<16xf32>
    %196 = vector.shape_cast %195 : vector<16xf32> to vector<16x1xf32>
    %cst_97 = arith.constant 3.200000e+01 : f32
    %197 = vector.broadcast %cst_97 : f32 to vector<16x1xf32>
    %198 = arith.divf %196, %197 : vector<16x1xf32>
    %199 = vector.broadcast %191 : vector<16x1xf32> to vector<16x32xf32>
    %200 = arith.subf %183, %199 : vector<16x32xf32>
    %cst_98 = arith.constant 9.99999974E-6 : f32
    %201 = vector.broadcast %cst_98 : f32 to vector<16x1xf32>
    %202 = arith.addf %198, %201 : vector<16x1xf32>
    %203 = math.rsqrt %202 : vector<16x1xf32>
    %204 = vector.broadcast %203 : vector<16x1xf32> to vector<16x32xf32>
    %205 = arith.mulf %200, %204 : vector<16x32xf32>
    %206 = vector.broadcast %185 : vector<1x32xf32> to vector<16x32xf32>
    %207 = arith.mulf %205, %206 : vector<16x32xf32>
    %208 = vector.broadcast %187 : vector<1x32xf32> to vector<16x32xf32>
    %209 = arith.addf %207, %208 : vector<16x32xf32>
    %c1_99 = arith.constant 1 : index
    %c0_100 = arith.constant 0 : index
    %c0_101 = arith.constant 0 : index
    %210 = vector.load %arg5[%c1_99, %c0_100, %c0_101] : memref<2x32x96xf32, #tpu.memory_space<vmem>>, vector<1x32x96xf32>
    %211 = vector.shape_cast %210 : vector<1x32x96xf32> to vector<32x96xf32>
    %cst_102 = arith.constant dense<0.000000e+00> : vector<16x96xf32>
    %212 = tpu.matmul %209, %211, %cst_102 {dimension_numbers = #tpu.dot_dimension_numbers<[1], [0], [0], [1], [0, 0, 1, 1], [], []>} : vector<16x32xf32>, vector<32x96xf32>, vector<16x96xf32> -> vector<16x96xf32>
    %c1_103 = arith.constant 1 : index
    %c0_104 = arith.constant 0 : index
    %c0_105 = arith.constant 0 : index
    %213 = vector.load %arg6[%c1_103, %c0_104, %c0_105] : memref<2x1x96xf32, #tpu.memory_space<vmem>>, vector<1x1x96xf32>
    %214 = vector.shape_cast %213 : vector<1x1x96xf32> to vector<1x96xf32>
    %215 = vector.broadcast %214 : vector<1x96xf32> to vector<16x96xf32>
    %216 = arith.addf %212, %215 : vector<16x96xf32>
    %217 = vector.extract_strided_slice %216 {offsets = [0, 0], sizes = [16, 32], strides = [1, 1]} : vector<16x96xf32> to vector<16x32xf32>
    %cst_106 = arith.constant 0.353553385 : f32
    %218 = vector.broadcast %cst_106 : f32 to vector<16x32xf32>
    %219 = arith.mulf %217, %218 : vector<16x32xf32>
    %220 = vector.shape_cast %219 : vector<16x32xf32> to vector<2x8x32xf32>
    %221 = vector.extract_strided_slice %216 {offsets = [0, 32], sizes = [16, 32], strides = [1, 1]} : vector<16x96xf32> to vector<16x32xf32>
    %222 = vector.shape_cast %221 : vector<16x32xf32> to vector<2x8x32xf32>
    %223 = vector.extract_strided_slice %216 {offsets = [0, 64], sizes = [16, 32], strides = [1, 1]} : vector<16x96xf32> to vector<16x32xf32>
    %224 = vector.shape_cast %223 : vector<16x32xf32> to vector<2x8x32xf32>
    %225 = vector.extract_strided_slice %220 {offsets = [0, 0, 0], sizes = [2, 8, 8], strides = [1, 1, 1]} : vector<2x8x32xf32> to vector<2x8x8xf32>
    %226 = vector.extract_strided_slice %222 {offsets = [0, 0, 0], sizes = [2, 8, 8], strides = [1, 1, 1]} : vector<2x8x32xf32> to vector<2x8x8xf32>
    %227 = vector.extract_strided_slice %224 {offsets = [0, 0, 0], sizes = [2, 8, 8], strides = [1, 1, 1]} : vector<2x8x32xf32> to vector<2x8x8xf32>
    "tpu.trace_start"() <{level = 10 : i32, message = "bqd,bkd->bqk"}> : () -> ()
    %cst_107 = arith.constant dense<0.000000e+00> : vector<2x8x8xf32>
    %228 = tpu.matmul %225, %226, %cst_107 {dimension_numbers = #tpu.dot_dimension_numbers<[2], [2], [1], [1], [0, 0, 0, 1, 1, 1], [0], [0]>} : vector<2x8x8xf32>, vector<2x8x8xf32>, vector<2x8x8xf32> -> vector<2x8x8xf32>
    "tpu.trace_stop"() : () -> ()
    %229 = vector.broadcast %11 : vector<1x8x8xf32> to vector<2x8x8xf32>
    %230 = arith.addf %228, %229 : vector<2x8x8xf32>
    %cst_108 = arith.constant dense<0xFF800000> : vector<2x8xf32>
    %231 = vector.multi_reduction <maximumf>, %230, %cst_108 [2] : vector<2x8x8xf32> to vector<2x8xf32>
    %232 = vector.shape_cast %231 : vector<2x8xf32> to vector<2x8x1xf32>
    %233 = vector.broadcast %232 : vector<2x8x1xf32> to vector<2x8x8xf32>
    %234 = arith.subf %230, %233 : vector<2x8x8xf32>
    %235 = math.exp %234 : vector<2x8x8xf32>
    %cst_109 = arith.constant dense<0.000000e+00> : vector<2x8xf32>
    %236 = vector.multi_reduction <add>, %235, %cst_109 [2] : vector<2x8x8xf32> to vector<2x8xf32>
    %237 = vector.shape_cast %236 : vector<2x8xf32> to vector<2x8x1xf32>
    %238 = tpu.reciprocal %237 {approx = true} : vector<2x8x1xf32> -> vector<2x8x1xf32>
    %239 = vector.broadcast %238 : vector<2x8x1xf32> to vector<2x8x8xf32>
    %240 = arith.mulf %235, %239 : vector<2x8x8xf32>
    "tpu.trace_start"() <{level = 10 : i32, message = "bqk,bkd->bqd"}> : () -> ()
    %cst_110 = arith.constant dense<0.000000e+00> : vector<2x8x8xf32>
    %241 = tpu.matmul %240, %227, %cst_110 {dimension_numbers = #tpu.dot_dimension_numbers<[2], [1], [1], [2], [0, 0, 0, 1, 1, 2], [0], [0]>} : vector<2x8x8xf32>, vector<2x8x8xf32>, vector<2x8x8xf32> -> vector<2x8x8xf32>
    "tpu.trace_stop"() : () -> ()
    %c0_111 = arith.constant 0 : index
    %c0_112 = arith.constant 0 : index
    %c0_113 = arith.constant 0 : index
    %242 = vector.load %arg18[%c0_111, %c0_112, %c0_113] : memref<2x8x32xf32, #tpu.memory_space<vmem>>, vector<2x8x8xf32>
    tpu.vector_store %arg18[%c0_111, %c0_112, %c0_113], %241 {strides = array<i32>} : memref<2x8x32xf32, #tpu.memory_space<vmem>>, vector<2x8x8xf32>,
    %243 = vector.extract_strided_slice %220 {offsets = [0, 0, 8], sizes = [2, 8, 8], strides = [1, 1, 1]} : vector<2x8x32xf32> to vector<2x8x8xf32>
    %244 = vector.extract_strided_slice %222 {offsets = [0, 0, 8], sizes = [2, 8, 8], strides = [1, 1, 1]} : vector<2x8x32xf32> to vector<2x8x8xf32>
    %245 = vector.extract_strided_slice %224 {offsets = [0, 0, 8], sizes = [2, 8, 8], strides = [1, 1, 1]} : vector<2x8x32xf32> to vector<2x8x8xf32>
    "tpu.trace_start"() <{level = 10 : i32, message = "bqd,bkd->bqk"}> : () -> ()
    %cst_114 = arith.constant dense<0.000000e+00> : vector<2x8x8xf32>
    %246 = tpu.matmul %243, %244, %cst_114 {dimension_numbers = #tpu.dot_dimension_numbers<[2], [2], [1], [1], [0, 0, 0, 1, 1, 1], [0], [0]>} : vector<2x8x8xf32>, vector<2x8x8xf32>, vector<2x8x8xf32> -> vector<2x8x8xf32>
    "tpu.trace_stop"() : () -> ()
    %247 = vector.broadcast %11 : vector<1x8x8xf32> to vector<2x8x8xf32>
    %248 = arith.addf %246, %247 : vector<2x8x8xf32>
    %cst_115 = arith.constant dense<0xFF800000> : vector<2x8xf32>
    %249 = vector.multi_reduction <maximumf>, %248, %cst_115 [2] : vector<2x8x8xf32> to vector<2x8xf32>
    %250 = vector.shape_cast %249 : vector<2x8xf32> to vector<2x8x1xf32>
    %251 = vector.broadcast %250 : vector<2x8x1xf32> to vector<2x8x8xf32>
    %252 = arith.subf %248, %251 : vector<2x8x8xf32>
    %253 = math.exp %252 : vector<2x8x8xf32>
    %cst_116 = arith.constant dense<0.000000e+00> : vector<2x8xf32>
    %254 = vector.multi_reduction <add>, %253, %cst_116 [2] : vector<2x8x8xf32> to vector<2x8xf32>
    %255 = vector.shape_cast %254 : vector<2x8xf32> to vector<2x8x1xf32>
    %256 = tpu.reciprocal %255 {approx = true} : vector<2x8x1xf32> -> vector<2x8x1xf32>
    %257 = vector.broadcast %256 : vector<2x8x1xf32> to vector<2x8x8xf32>
    %258 = arith.mulf %253, %257 : vector<2x8x8xf32>
    "tpu.trace_start"() <{level = 10 : i32, message = "bqk,bkd->bqd"}> : () -> ()
    %cst_117 = arith.constant dense<0.000000e+00> : vector<2x8x8xf32>
    %259 = tpu.matmul %258, %245, %cst_117 {dimension_numbers = #tpu.dot_dimension_numbers<[2], [1], [1], [2], [0, 0, 0, 1, 1, 2], [0], [0]>} : vector<2x8x8xf32>, vector<2x8x8xf32>, vector<2x8x8xf32> -> vector<2x8x8xf32>
    "tpu.trace_stop"() : () -> ()
    %c0_118 = arith.constant 0 : index
    %c0_119 = arith.constant 0 : index
    %c8_120 = arith.constant 8 : index
    %260 = vector.load %arg18[%c0_118, %c0_119, %c8_120] : memref<2x8x32xf32, #tpu.memory_space<vmem>>, vector<2x8x8xf32>
    tpu.vector_store %arg18[%c0_118, %c0_119, %c8_120], %259 {strides = array<i32>} : memref<2x8x32xf32, #tpu.memory_space<vmem>>, vector<2x8x8xf32>,
    %261 = vector.extract_strided_slice %220 {offsets = [0, 0, 16], sizes = [2, 8, 8], strides = [1, 1, 1]} : vector<2x8x32xf32> to vector<2x8x8xf32>
    %262 = vector.extract_strided_slice %222 {offsets = [0, 0, 16], sizes = [2, 8, 8], strides = [1, 1, 1]} : vector<2x8x32xf32> to vector<2x8x8xf32>
    %263 = vector.extract_strided_slice %224 {offsets = [0, 0, 16], sizes = [2, 8, 8], strides = [1, 1, 1]} : vector<2x8x32xf32> to vector<2x8x8xf32>
    "tpu.trace_start"() <{level = 10 : i32, message = "bqd,bkd->bqk"}> : () -> ()
    %cst_121 = arith.constant dense<0.000000e+00> : vector<2x8x8xf32>
    %264 = tpu.matmul %261, %262, %cst_121 {dimension_numbers = #tpu.dot_dimension_numbers<[2], [2], [1], [1], [0, 0, 0, 1, 1, 1], [0], [0]>} : vector<2x8x8xf32>, vector<2x8x8xf32>, vector<2x8x8xf32> -> vector<2x8x8xf32>
    "tpu.trace_stop"() : () -> ()
    %265 = vector.broadcast %11 : vector<1x8x8xf32> to vector<2x8x8xf32>
    %266 = arith.addf %264, %265 : vector<2x8x8xf32>
    %cst_122 = arith.constant dense<0xFF800000> : vector<2x8xf32>
    %267 = vector.multi_reduction <maximumf>, %266, %cst_122 [2] : vector<2x8x8xf32> to vector<2x8xf32>
    %268 = vector.shape_cast %267 : vector<2x8xf32> to vector<2x8x1xf32>
    %269 = vector.broadcast %268 : vector<2x8x1xf32> to vector<2x8x8xf32>
    %270 = arith.subf %266, %269 : vector<2x8x8xf32>
    %271 = math.exp %270 : vector<2x8x8xf32>
    %cst_123 = arith.constant dense<0.000000e+00> : vector<2x8xf32>
    %272 = vector.multi_reduction <add>, %271, %cst_123 [2] : vector<2x8x8xf32> to vector<2x8xf32>
    %273 = vector.shape_cast %272 : vector<2x8xf32> to vector<2x8x1xf32>
    %274 = tpu.reciprocal %273 {approx = true} : vector<2x8x1xf32> -> vector<2x8x1xf32>
    %275 = vector.broadcast %274 : vector<2x8x1xf32> to vector<2x8x8xf32>
    %276 = arith.mulf %271, %275 : vector<2x8x8xf32>
    "tpu.trace_start"() <{level = 10 : i32, message = "bqk,bkd->bqd"}> : () -> ()
    %cst_124 = arith.constant dense<0.000000e+00> : vector<2x8x8xf32>
    %277 = tpu.matmul %276, %263, %cst_124 {dimension_numbers = #tpu.dot_dimension_numbers<[2], [1], [1], [2], [0, 0, 0, 1, 1, 2], [0], [0]>} : vector<2x8x8xf32>, vector<2x8x8xf32>, vector<2x8x8xf32> -> vector<2x8x8xf32>
    "tpu.trace_stop"() : () -> ()
    %c0_125 = arith.constant 0 : index
    %c0_126 = arith.constant 0 : index
    %c16_127 = arith.constant 16 : index
    %278 = vector.load %arg18[%c0_125, %c0_126, %c16_127] : memref<2x8x32xf32, #tpu.memory_space<vmem>>, vector<2x8x8xf32>
    tpu.vector_store %arg18[%c0_125, %c0_126, %c16_127], %277 {strides = array<i32>} : memref<2x8x32xf32, #tpu.memory_space<vmem>>, vector<2x8x8xf32>,
    %279 = vector.extract_strided_slice %220 {offsets = [0, 0, 24], sizes = [2, 8, 8], strides = [1, 1, 1]} : vector<2x8x32xf32> to vector<2x8x8xf32>
    %280 = vector.extract_strided_slice %222 {offsets = [0, 0, 24], sizes = [2, 8, 8], strides = [1, 1, 1]} : vector<2x8x32xf32> to vector<2x8x8xf32>
    %281 = vector.extract_strided_slice %224 {offsets = [0, 0, 24], sizes = [2, 8, 8], strides = [1, 1, 1]} : vector<2x8x32xf32> to vector<2x8x8xf32>
    "tpu.trace_start"() <{level = 10 : i32, message = "bqd,bkd->bqk"}> : () -> ()
    %cst_128 = arith.constant dense<0.000000e+00> : vector<2x8x8xf32>
    %282 = tpu.matmul %279, %280, %cst_128 {dimension_numbers = #tpu.dot_dimension_numbers<[2], [2], [1], [1], [0, 0, 0, 1, 1, 1], [0], [0]>} : vector<2x8x8xf32>, vector<2x8x8xf32>, vector<2x8x8xf32> -> vector<2x8x8xf32>
    "tpu.trace_stop"() : () -> ()
    %283 = vector.broadcast %11 : vector<1x8x8xf32> to vector<2x8x8xf32>
    %284 = arith.addf %282, %283 : vector<2x8x8xf32>
    %cst_129 = arith.constant dense<0xFF800000> : vector<2x8xf32>
    %285 = vector.multi_reduction <maximumf>, %284, %cst_129 [2] : vector<2x8x8xf32> to vector<2x8xf32>
    %286 = vector.shape_cast %285 : vector<2x8xf32> to vector<2x8x1xf32>
    %287 = vector.broadcast %286 : vector<2x8x1xf32> to vector<2x8x8xf32>
    %288 = arith.subf %284, %287 : vector<2x8x8xf32>
    %289 = math.exp %288 : vector<2x8x8xf32>
    %cst_130 = arith.constant dense<0.000000e+00> : vector<2x8xf32>
    %290 = vector.multi_reduction <add>, %289, %cst_130 [2] : vector<2x8x8xf32> to vector<2x8xf32>
    %291 = vector.shape_cast %290 : vector<2x8xf32> to vector<2x8x1xf32>
    %292 = tpu.reciprocal %291 {approx = true} : vector<2x8x1xf32> -> vector<2x8x1xf32>
    %293 = vector.broadcast %292 : vector<2x8x1xf32> to vector<2x8x8xf32>
    %294 = arith.mulf %289, %293 : vector<2x8x8xf32>
    "tpu.trace_start"() <{level = 10 : i32, message = "bqk,bkd->bqd"}> : () -> ()
    %cst_131 = arith.constant dense<0.000000e+00> : vector<2x8x8xf32>
    %295 = tpu.matmul %294, %281, %cst_131 {dimension_numbers = #tpu.dot_dimension_numbers<[2], [1], [1], [2], [0, 0, 0, 1, 1, 2], [0], [0]>} : vector<2x8x8xf32>, vector<2x8x8xf32>, vector<2x8x8xf32> -> vector<2x8x8xf32>
    "tpu.trace_stop"() : () -> ()
    %c0_132 = arith.constant 0 : index
    %c0_133 = arith.constant 0 : index
    %c24_134 = arith.constant 24 : index
    %296 = vector.load %arg18[%c0_132, %c0_133, %c24_134] : memref<2x8x32xf32, #tpu.memory_space<vmem>>, vector<2x8x8xf32>
    tpu.vector_store %arg18[%c0_132, %c0_133, %c24_134], %295 {strides = array<i32>} : memref<2x8x32xf32, #tpu.memory_space<vmem>>, vector<2x8x8xf32>,
    %c0_135 = arith.constant 0 : index
    %c0_136 = arith.constant 0 : index
    %c0_137 = arith.constant 0 : index
    %297 = vector.load %arg18[%c0_135, %c0_136, %c0_137] : memref<2x8x32xf32, #tpu.memory_space<vmem>>, vector<2x8x32xf32>
    %298 = vector.shape_cast %297 : vector<2x8x32xf32> to vector<16x32xf32>
    %c1_138 = arith.constant 1 : index
    %c0_139 = arith.constant 0 : index
    %c0_140 = arith.constant 0 : index
    %299 = vector.load %arg7[%c1_138, %c0_139, %c0_140] : memref<2x32x32xf32, #tpu.memory_space<vmem>>, vector<1x32x32xf32>
    %300 = vector.shape_cast %299 : vector<1x32x32xf32> to vector<32x32xf32>
    %cst_141 = arith.constant dense<0.000000e+00> : vector<16x32xf32>
    %301 = tpu.matmul %298, %300, %cst_141 {dimension_numbers = #tpu.dot_dimension_numbers<[1], [0], [0], [1], [0, 0, 1, 1], [], []>} : vector<16x32xf32>, vector<32x32xf32>, vector<16x32xf32> -> vector<16x32xf32>
    %c1_142 = arith.constant 1 : index
    %c0_143 = arith.constant 0 : index
    %c0_144 = arith.constant 0 : index
    %302 = vector.load %arg8[%c1_142, %c0_143, %c0_144] : memref<2x1x32xf32, #tpu.memory_space<vmem>>, vector<1x1x32xf32>
    %303 = vector.shape_cast %302 : vector<1x1x32xf32> to vector<1x32xf32>
    %304 = vector.broadcast %303 : vector<1x32xf32> to vector<16x32xf32>
    %305 = arith.addf %301, %304 : vector<16x32xf32>
    %306 = arith.addf %183, %305 : vector<16x32xf32>
    %c1_145 = arith.constant 1 : index
    %c0_146 = arith.constant 0 : index
    %c0_147 = arith.constant 0 : index
    %307 = vector.load %arg9[%c1_145, %c0_146, %c0_147] : memref<2x1x32xf32, #tpu.memory_space<vmem>>, vector<1x1x32xf32>
    %308 = vector.shape_cast %307 : vector<1x1x32xf32> to vector<1x32xf32>
    %c1_148 = arith.constant 1 : index
    %c0_149 = arith.constant 0 : index
    %c0_150 = arith.constant 0 : index
    %309 = vector.load %arg10[%c1_148, %c0_149, %c0_150] : memref<2x1x32xf32, #tpu.memory_space<vmem>>, vector<1x1x32xf32>
    %310 = vector.shape_cast %309 : vector<1x1x32xf32> to vector<1x32xf32>
    %cst_151 = arith.constant dense<0.000000e+00> : vector<16xf32>
    %311 = vector.multi_reduction <add>, %306, %cst_151 [1] : vector<16x32xf32> to vector<16xf32>
    %312 = vector.shape_cast %311 : vector<16xf32> to vector<16x1xf32>
    %cst_152 = arith.constant 3.200000e+01 : f32
    %313 = vector.broadcast %cst_152 : f32 to vector<16x1xf32>
    %314 = arith.divf %312, %313 : vector<16x1xf32>
    %315 = vector.broadcast %314 : vector<16x1xf32> to vector<16x32xf32>
    %316 = arith.subf %306, %315 : vector<16x32xf32>
    %317 = arith.mulf %316, %316 : vector<16x32xf32>
    %cst_153 = arith.constant dense<0.000000e+00> : vector<16xf32>
    %318 = vector.multi_reduction <add>, %317, %cst_153 [1] : vector<16x32xf32> to vector<16xf32>
    %319 = vector.shape_cast %318 : vector<16xf32> to vector<16x1xf32>
    %cst_154 = arith.constant 3.200000e+01 : f32
    %320 = vector.broadcast %cst_154 : f32 to vector<16x1xf32>
    %321 = arith.divf %319, %320 : vector<16x1xf32>
    %322 = vector.broadcast %314 : vector<16x1xf32> to vector<16x32xf32>
    %323 = arith.subf %306, %322 : vector<16x32xf32>
    %cst_155 = arith.constant 9.99999974E-6 : f32
    %324 = vector.broadcast %cst_155 : f32 to vector<16x1xf32>
    %325 = arith.addf %321, %324 : vector<16x1xf32>
    %326 = math.rsqrt %325 : vector<16x1xf32>
    %327 = vector.broadcast %326 : vector<16x1xf32> to vector<16x32xf32>
    %328 = arith.mulf %323, %327 : vector<16x32xf32>
    %329 = vector.broadcast %308 : vector<1x32xf32> to vector<16x32xf32>
    %330 = arith.mulf %328, %329 : vector<16x32xf32>
    %331 = vector.broadcast %310 : vector<1x32xf32> to vector<16x32xf32>
    %332 = arith.addf %330, %331 : vector<16x32xf32>
    %c1_156 = arith.constant 1 : index
    %c0_157 = arith.constant 0 : index
    %c0_158 = arith.constant 0 : index
    %333 = vector.load %arg11[%c1_156, %c0_157, %c0_158] : memref<2x32x128xf32, #tpu.memory_space<vmem>>, vector<1x32x128xf32>
    %334 = vector.shape_cast %333 : vector<1x32x128xf32> to vector<32x128xf32>
    %cst_159 = arith.constant dense<0.000000e+00> : vector<16x128xf32>
    %335 = tpu.matmul %332, %334, %cst_159 {dimension_numbers = #tpu.dot_dimension_numbers<[1], [0], [0], [1], [0, 0, 1, 1], [], []>} : vector<16x32xf32>, vector<32x128xf32>, vector<16x128xf32> -> vector<16x128xf32>
    %c1_160 = arith.constant 1 : index
    %c0_161 = arith.constant 0 : index
    %c0_162 = arith.constant 0 : index
    %336 = vector.load %arg12[%c1_160, %c0_161, %c0_162] : memref<2x1x128xf32, #tpu.memory_space<vmem>>, vector<1x1x128xf32>
    %337 = vector.shape_cast %336 : vector<1x1x128xf32> to vector<1x128xf32>
    %338 = vector.broadcast %337 : vector<1x128xf32> to vector<16x128xf32>
    %339 = arith.addf %335, %338 : vector<16x128xf32>
    %cst_163 = arith.constant 5.000000e-01 : f32
    %340 = vector.broadcast %cst_163 : f32 to vector<16x128xf32>
    %341 = arith.mulf %340, %339 : vector<16x128xf32>
    %cst_164 = arith.constant 0.707106769 : f32
    %342 = vector.broadcast %cst_164 : f32 to vector<16x128xf32>
    %343 = arith.mulf %339, %342 : vector<16x128xf32>
    %344 = math.erf %343 : vector<16x128xf32>
    %cst_165 = arith.constant 1.000000e+00 : f32
    %345 = vector.broadcast %cst_165 : f32 to vector<16x128xf32>
    %346 = arith.addf %345, %344 : vector<16x128xf32>
    %347 = arith.mulf %341, %346 : vector<16x128xf32>
    %c1_166 = arith.constant 1 : index
    %c0_167 = arith.constant 0 : index
    %c0_168 = arith.constant 0 : index
    %348 = vector.load %arg13[%c1_166, %c0_167, %c0_168] : memref<2x128x32xf32, #tpu.memory_space<vmem>>, vector<1x128x32xf32>
    %349 = vector.shape_cast %348 : vector<1x128x32xf32> to vector<128x32xf32>
    %cst_169 = arith.constant dense<0.000000e+00> : vector<16x32xf32>
    %350 = tpu.matmul %347, %349, %cst_169 {dimension_numbers = #tpu.dot_dimension_numbers<[1], [0], [0], [1], [0, 0, 1, 1], [], []>} : vector<16x128xf32>, vector<128x32xf32>, vector<16x32xf32> -> vector<16x32xf32>
    %c1_170 = arith.constant 1 : index
    %c0_171 = arith.constant 0 : index
    %c0_172 = arith.constant 0 : index
    %351 = vector.load %arg14[%c1_170, %c0_171, %c0_172] : memref<2x1x32xf32, #tpu.memory_space<vmem>>, vector<1x1x32xf32>
    %352 = vector.shape_cast %351 : vector<1x1x32xf32> to vector<1x32xf32>
    %353 = vector.broadcast %352 : vector<1x32xf32> to vector<16x32xf32>
    %354 = arith.addf %350, %353 : vector<16x32xf32>
    %355 = arith.addf %306, %354 : vector<16x32xf32>
    %c0_173 = arith.constant 0 : index
    %c0_174 = arith.constant 0 : index
    %356 = vector.load %arg15[%c0_173, %c0_174] : memref<1x32xf32, #tpu.memory_space<vmem>>, vector<1x32xf32>
    %c0_175 = arith.constant 0 : index
    %c0_176 = arith.constant 0 : index
    %357 = vector.load %arg16[%c0_175, %c0_176] : memref<1x32xf32, #tpu.memory_space<vmem>>, vector<1x32xf32>
    %cst_177 = arith.constant dense<0.000000e+00> : vector<16xf32>
    %358 = vector.multi_reduction <add>, %355, %cst_177 [1] : vector<16x32xf32> to vector<16xf32>
    %359 = vector.shape_cast %358 : vector<16xf32> to vector<16x1xf32>
    %cst_178 = arith.constant 3.200000e+01 : f32
    %360 = vector.broadcast %cst_178 : f32 to vector<16x1xf32>
    %361 = arith.divf %359, %360 : vector<16x1xf32>
    %362 = vector.broadcast %361 : vector<16x1xf32> to vector<16x32xf32>
    %363 = arith.subf %355, %362 : vector<16x32xf32>
    %364 = arith.mulf %363, %363 : vector<16x32xf32>
    %cst_179 = arith.constant dense<0.000000e+00> : vector<16xf32>
    %365 = vector.multi_reduction <add>, %364, %cst_179 [1] : vector<16x32xf32> to vector<16xf32>
    %366 = vector.shape_cast %365 : vector<16xf32> to vector<16x1xf32>
    %cst_180 = arith.constant 3.200000e+01 : f32
    %367 = vector.broadcast %cst_180 : f32 to vector<16x1xf32>
    %368 = arith.divf %366, %367 : vector<16x1xf32>
    %369 = vector.broadcast %361 : vector<16x1xf32> to vector<16x32xf32>
    %370 = arith.subf %355, %369 : vector<16x32xf32>
    %cst_181 = arith.constant 9.99999974E-6 : f32
    %371 = vector.broadcast %cst_181 : f32 to vector<16x1xf32>
    %372 = arith.addf %368, %371 : vector<16x1xf32>
    %373 = math.rsqrt %372 : vector<16x1xf32>
    %374 = vector.broadcast %373 : vector<16x1xf32> to vector<16x32xf32>
    %375 = arith.mulf %370, %374 : vector<16x32xf32>
    %376 = vector.broadcast %356 : vector<1x32xf32> to vector<16x32xf32>
    %377 = arith.mulf %375, %376 : vector<16x32xf32>
    %378 = vector.broadcast %357 : vector<1x32xf32> to vector<16x32xf32>
    %379 = arith.addf %377, %378 : vector<16x32xf32>
    %c0_182 = arith.constant 0 : index
    %c0_183 = arith.constant 0 : index
    %380 = vector.load %arg17[%c0_182, %c0_183] : memref<16x32xf32, #tpu.memory_space<vmem>>, vector<16x32xf32>
    tpu.vector_store %arg17[%c0_182, %c0_183], %379 {strides = array<i32>} : memref<16x32xf32, #tpu.memory_space<vmem>>, vector<16x32xf32>,
    return
  }
}

</mosaic_0001>

<llo_original>
// kernel: tpu_custom_call.1
$region0: #{tpu_custom_call.1}
  #allocation0 [shape = 'u32[]', space=smem, size = 0x4, offset = 0x4, fixed_abs, tag = 'smem constant byte address 0x4 - core index']
  #allocation1 [shape = 'u32[72,128]{1,0:T(1,128)}', space=vmem, size = 0x9000, scoped, tag = 'internal scratch']
  #allocation2 [shape = 'f32[2,8,32]{2,1,0:T(8,128)}', space=vmem, size = 0x2000, scoped, tag = 'scratch operand']
  %s0 = inlined_call_operand.vmem [shape: f32[16,64], index: 0, kind: input, shape index: {}]
  %s1 = inlined_call_operand.vmem [shape: f32[64,32], index: 1, kind: input, shape index: {}]
  %s2 = inlined_call_operand.vmem [shape: f32[16,32], index: 2, kind: input, shape index: {}]
  %s3 = inlined_call_operand.vmem [shape: f32[2,1,32], index: 3, kind: input, shape index: {}]
  %s4 = inlined_call_operand.vmem [shape: f32[2,1,32], index: 4, kind: input, shape index: {}]
  %s5 = inlined_call_operand.vmem [shape: f32[2,32,96], index: 5, kind: input, shape index: {}]
  %s6 = inlined_call_operand.vmem [shape: f32[2,1,96], index: 6, kind: input, shape index: {}]
  %s7 = inlined_call_operand.vmem [shape: f32[2,32,32], index: 7, kind: input, shape index: {}]
  %s8 = inlined_call_operand.vmem [shape: f32[2,1,32], index: 8, kind: input, shape index: {}]
  %s9 = inlined_call_operand.vmem [shape: f32[2,1,32], index: 9, kind: input, shape index: {}]
  %s10 = inlined_call_operand.vmem [shape: f32[2,1,32], index: 10, kind: input, shape index: {}]
  %s11 = inlined_call_operand.vmem [shape: f32[2,32,128], index: 11, kind: input, shape index: {}]
  %s12 = inlined_call_operand.vmem [shape: f32[2,1,128], index: 12, kind: input, shape index: {}]
  %s13 = inlined_call_operand.vmem [shape: f32[2,128,32], index: 13, kind: input, shape index: {}]
  %s14 = inlined_call_operand.vmem [shape: f32[2,1,32], index: 14, kind: input, shape index: {}]
  %s15 = inlined_call_operand.vmem [shape: f32[1,32], index: 15, kind: input, shape index: {}]
  %s16 = inlined_call_operand.vmem [shape: f32[1,32], index: 16, kind: input, shape index: {}]
  %s17 = inlined_call_operand.hbm [shape: f32[16,32], index: 17, kind: output, shape index: {}]
  %s18 = sld [smem:[#allocation0]]
  $region78: #{tpu_custom_call.1} parent=0
    _
  %s20 = ssub.s32 1, %s18
  %s21 = scalar_select 0, %s20, %s18
  $region1: #{tpu_custom_call.1} parent=0
    #allocation3 [shape = 'u8[8192]{0}', space=vmem, size = 0x2000, scoped, tag = 'output window, operand 0, single buffered']
    #allocation4 [shape = 's32[1]{0}', space=sflag, size = 0x4, scoped, tag = 'scoped memory for tpu_custom_call.1']
    %22 = vsyncpa [#allocation4], 0
    // Predicated region
    $region2: #{tpu_custom_call.1} parent=1 // pred_check
      _
    $region3: #{tpu_custom_call.1} parent=1 // pred_check_branch
      %24 = sbr.rel (0) target = $region5
    $region4: #{tpu_custom_call.1} parent=1 // pred_region
      _
    $region5: #{tpu_custom_call.1} parent=1 // pred_fallthru
      _
    // Predicated region
    $region6: #{tpu_custom_call.1} parent=1 // pred_check
      _
    $region7: #{tpu_custom_call.1} parent=1 // pred_check_branch
      %26 = sbr.rel (0) target = $region9
    $region8: #{tpu_custom_call.1} parent=1 // pred_region
      _
    $region9: #{tpu_custom_call.1} parent=1 // pred_fallthru
      _
    // Predicated region
    $region10: #{tpu_custom_call.1} parent=1 // pred_check
      _
    $region11: #{tpu_custom_call.1} parent=1 // pred_check_branch
      %28 = sbr.rel (0) target = $region13
    $region12: #{tpu_custom_call.1} parent=1 // pred_region
      _
    $region13: #{tpu_custom_call.1} parent=1 // pred_fallthru
      _
    // Predicated region
    $region14: #{tpu_custom_call.1} parent=1 // pred_check
      _
    $region15: #{tpu_custom_call.1} parent=1 // pred_check_branch
      %30 = sbr.rel (0) target = $region17
    $region16: #{tpu_custom_call.1} parent=1 // pred_region
      _
    $region17: #{tpu_custom_call.1} parent=1 // pred_fallthru
      _
    // Predicated region
    $region18: #{tpu_custom_call.1} parent=1 // pred_check
      _
    $region19: #{tpu_custom_call.1} parent=1 // pred_check_branch
      %32 = sbr.rel (0) target = $region21
    $region20: #{tpu_custom_call.1} parent=1 // pred_region
      _
    $region21: #{tpu_custom_call.1} parent=1 // pred_fallthru
      _
    // Predicated region
    $region22: #{tpu_custom_call.1} parent=1 // pred_check
      _
    $region23: #{tpu_custom_call.1} parent=1 // pred_check_branch
      %34 = sbr.rel (0) target = $region25
    $region24: #{tpu_custom_call.1} parent=1 // pred_region
      _
    $region25: #{tpu_custom_call.1} parent=1 // pred_fallthru
      _
    // Predicated region
    $region26: #{tpu_custom_call.1} parent=1 // pred_check
      _
    $region27: #{tpu_custom_call.1} parent=1 // pred_check_branch
      %36 = sbr.rel (0) target = $region29
    $region28: #{tpu_custom_call.1} parent=1 // pred_region
      _
    $region29: #{tpu_custom_call.1} parent=1 // pred_fallthru
      _
    // Predicated region
    $region30: #{tpu_custom_call.1} parent=1 // pred_check
      _
    $region31: #{tpu_custom_call.1} parent=1 // pred_check_branch
      %38 = sbr.rel (0) target = $region33
    $region32: #{tpu_custom_call.1} parent=1 // pred_region
      _
    $region33: #{tpu_custom_call.1} parent=1 // pred_fallthru
      _
    // Predicated region
    $region34: #{tpu_custom_call.1} parent=1 // pred_check
      _
    $region35: #{tpu_custom_call.1} parent=1 // pred_check_branch
      %40 = sbr.rel (0) target = $region37
    $region36: #{tpu_custom_call.1} parent=1 // pred_region
      _
    $region37: #{tpu_custom_call.1} parent=1 // pred_fallthru
      _
    // Predicated region
    $region38: #{tpu_custom_call.1} parent=1 // pred_check
      _
    $region39: #{tpu_custom_call.1} parent=1 // pred_check_branch
      %42 = sbr.rel (0) target = $region41
    $region40: #{tpu_custom_call.1} parent=1 // pred_region
      _
    $region41: #{tpu_custom_call.1} parent=1 // pred_fallthru
      _
    // Predicated region
    $region42: #{tpu_custom_call.1} parent=1 // pred_check
      _
    $region43: #{tpu_custom_call.1} parent=1 // pred_check_branch
      %44 = sbr.rel (0) target = $region45
    $region44: #{tpu_custom_call.1} parent=1 // pred_region
      _
    $region45: #{tpu_custom_call.1} parent=1 // pred_fallthru
      _
    // Predicated region
    $region46: #{tpu_custom_call.1} parent=1 // pred_check
      _
    $region47: #{tpu_custom_call.1} parent=1 // pred_check_branch
      %46 = sbr.rel (0) target = $region49
    $region48: #{tpu_custom_call.1} parent=1 // pred_region
      _
    $region49: #{tpu_custom_call.1} parent=1 // pred_fallthru
      _
    // Predicated region
    $region50: #{tpu_custom_call.1} parent=1 // pred_check
      _
    $region51: #{tpu_custom_call.1} parent=1 // pred_check_branch
      %48 = sbr.rel (0) target = $region53
    $region52: #{tpu_custom_call.1} parent=1 // pred_region
      _
    $region53: #{tpu_custom_call.1} parent=1 // pred_fallthru
      _
    // Predicated region
    $region54: #{tpu_custom_call.1} parent=1 // pred_check
      _
    $region55: #{tpu_custom_call.1} parent=1 // pred_check_branch
      %50 = sbr.rel (0) target = $region57
    $region56: #{tpu_custom_call.1} parent=1 // pred_region
      _
    $region57: #{tpu_custom_call.1} parent=1 // pred_fallthru
      _
    // Predicated region
    $region58: #{tpu_custom_call.1} parent=1 // pred_check
      _
    $region59: #{tpu_custom_call.1} parent=1 // pred_check_branch
      %52 = sbr.rel (0) target = $region61
    $region60: #{tpu_custom_call.1} parent=1 // pred_region
      _
    $region61: #{tpu_custom_call.1} parent=1 // pred_fallthru
      _
    // Predicated region
    $region62: #{tpu_custom_call.1} parent=1 // pred_check
      _
    $region63: #{tpu_custom_call.1} parent=1 // pred_check_branch
      %54 = sbr.rel (0) target = $region65
    $region64: #{tpu_custom_call.1} parent=1 // pred_region
      _
    $region65: #{tpu_custom_call.1} parent=1 // pred_fallthru
      _
    // Predicated region
    $region66: #{tpu_custom_call.1} parent=1 // pred_check
      _
    $region67: #{tpu_custom_call.1} parent=1 // pred_check_branch
      %56 = sbr.rel (0) target = $region69
    $region68: #{tpu_custom_call.1} parent=1 // pred_region
      _
    $region69: #{tpu_custom_call.1} parent=1 // pred_fallthru
      _
    %v57 = vld [vmem:[%s0] sm:$0xff]
    %v58 = vld [vmem:[%s0 + $0x8] sm:$0xff]
    %v59 = vld [vmem:[%s1] sm:$0xff]
    %v60 = vld [vmem:[%s1 + $0x8] sm:$0xff]
    %v61 = vld [vmem:[%s1 + $0x10] sm:$0xff]
    %v62 = vld [vmem:[%s1 + $0x18] sm:$0xff]
    %v63 = vld [vmem:[%s1 + $0x20] sm:$0xff]
    %v64 = vld [vmem:[%s1 + $0x28] sm:$0xff]
    %v65 = vld [vmem:[%s1 + $0x30] sm:$0xff]
    %v66 = vld [vmem:[%s1 + $0x38] sm:$0xff]
    %v67 = vld [vmem:[%s2] sm:$0xff]
    %v68 = vld [vmem:[%s2 + $0x8] sm:$0xff]
    %vm69 = vcmask 523264
    %v71 = vsel %vm69, %v57, 0
    %v74 = vsel %vm69, %v58, 0
    %76 = vmatpush.msra.mxu0 0.0
    %77 = vmatpush.msra.mxu0 0.0
    %78 = vmatpush.msra.mxu0 0.0
    %79 = vmatpush.msra.mxu0 0.0
    %80 = vmatpush.msra.mxu0 0.0
    %81 = vmatpush.msra.mxu0 0.0
    %82 = vmatpush.msra.mxu0 0.0
    %83 = vmatpush.msra.mxu0 0.0
    %84 = vmatpush.msra.mxu0 %v66
    %85 = vmatpush.msra.mxu0 %v65
    %86 = vmatpush.msra.mxu0 %v64
    %87 = vmatpush.msra.mxu0 %v63
    %88 = vmatpush.msra.mxu0 %v62
    %89 = vmatpush.msra.mxu0 %v61
    %90 = vmatpush.msra.mxu0 %v60
    %91 = vmatpush.msra.mxu0 %v59
    %92 = vmatmul.f32.gmra.mxu0 %v71
    %v93 = vpop.f32.mrf.mxu0
    %v94 = vadd.f32 %v67, %v93
    %95 = vmatmul.f32.gmra.mxu0 %v74
    %v96 = vpop.f32.mrf.mxu0
    %v97 = vadd.f32 %v68, %v96
    %98 = vdwg.mxu0
    %v99 = vlaneseq
    %v100 = vshrl.u32 %v99, 7
    %v101 = vlaneseq
    %v102 = vand.u32 %v101, 127
    %vm103 = vcmp.ge.s32.totalorder %v100, %v102
    %v104 = vsel %vm103, 0.0, -1e+10
    %v105 = vld [vmem:[%s3] sm:$0x1]
    %v106 = vld [vmem:[%s4] sm:$0x1]
    %vm107 = vcmask 261120
    %v108 = vsel %vm107, %v94, 0.0
    %109 = vadd.xlane.f32.xlu0 %v108
    %v110 = vpop.xlane.xlu0 %109
    %v111 = vsel %vm107, %v97, 0.0
    %112 = vadd.xlane.f32.xlu0 %v111
    %v113 = vpop.xlane.xlu0 %112
    %v114 = vrcp.pop 32.0
    %v115 = vmul.f32 32.0, %v114
    %v116 = vsub.f32 1.0, %v115
    %v117 = vmul.f32 %v114, %v116
    %v118 = vadd.f32 %v114, %v117
    %vm119 = vweird.f32 %v114
    %v120 = vsel %vm119, %v114, %v118
    %v121 = vmul.f32 %v110, %v120
    %v122 = vmul.f32 %v113, %v120
    %v123 = vsub.f32 %v94, %v121
    %v124 = vsub.f32 %v97, %v122
    %v125 = vmul.f32 %v123, %v123
    %v126 = vmul.f32 %v124, %v124
    %v127 = vsel %vm107, %v125, 0.0
    %128 = vadd.xlane.f32.xlu0 %v127
    %v129 = vpop.xlane.xlu0 %128
    %v130 = vsel %vm107, %v126, 0.0
    %131 = vadd.xlane.f32.xlu0 %v130
    %v132 = vpop.xlane.xlu0 %131
    %v133 = vmul.f32 %v129, %v120
    %v134 = vmul.f32 %v132, %v120
    %v135 = vadd.f32 %v133, 1e-05
    %v136 = vadd.f32 %v134, 1e-05
    %v137 = vrsqrt.pop %v135
    %v138 = vmul.f32 %v137, %v135
    %v139 = vmul.f32 %v138, %v137
    %v140 = vmul.f32 0.5, %v139
    %v141 = vsub.f32 1.5, %v140
    %v142 = vmul.f32 %v137, %v141
    %vm143 = vweird.f32 %v135
    %vm144 = vweird.f32 %v137
    %vm145 = vmor %vm143, %vm144
    %v146 = vsel %vm145, %v137, %v142
    %v147 = vrsqrt.pop %v136
    %v148 = vmul.f32 %v147, %v136
    %v149 = vmul.f32 %v148, %v147
    %v150 = vmul.f32 0.5, %v149
    %v151 = vsub.f32 1.5, %v150
    %v152 = vmul.f32 %v147, %v151
    %vm153 = vweird.f32 %v136
    %vm154 = vweird.f32 %v147
    %vm155 = vmor %vm153, %vm154
    %v156 = vsel %vm155, %v147, %v152
    %v157 = vmul.f32 %v123, %v146
    %v158 = vmul.f32 %v124, %v156
    %v160 = vperm.slane %v105, 0
    %v162 = vmul.f32 %v157, %v160
    %v163 = vmul.f32 %v158, %v160
    %v165 = vperm.slane %v106, 0
    %v167 = vadd.f32 %v162, %v165
    %v168 = vadd.f32 %v163, %v165
    %v169 = vld [vmem:[%s5] sm:$0xff]
    %v170 = vld [vmem:[%s5 + $0x8] sm:$0xff]
    %v171 = vld [vmem:[%s5 + $0x10] sm:$0xff]
    %v172 = vld [vmem:[%s5 + $0x18] sm:$0xff]
    %v173 = vld [vmem:[%s6] sm:$0x1]
    %v175 = vperm.slane %v173, 0
    %v178 = vsel %vm107, %v167, 0
    %v181 = vsel %vm107, %v168, 0
    %183 = vmatpush.msra.mxu0 0.0
    %184 = vmatpush.msra.mxu0 0.0
    %185 = vmatpush.msra.mxu0 0.0
    %186 = vmatpush.msra.mxu0 0.0
    %187 = vmatpush.msra.mxu0 0.0
    %188 = vmatpush.msra.mxu0 0.0
    %189 = vmatpush.msra.mxu0 0.0
    %190 = vmatpush.msra.mxu0 0.0
    %191 = vmatpush.msra.mxu0 0.0
    %192 = vmatpush.msra.mxu0 0.0
    %193 = vmatpush.msra.mxu0 0.0
    %194 = vmatpush.msra.mxu0 0.0
    %195 = vmatpush.msra.mxu0 %v172
    %196 = vmatpush.msra.mxu0 %v171
    %197 = vmatpush.msra.mxu0 %v170
    %198 = vmatpush.msra.mxu0 %v169
    %199 = vmatmul.f32.gmra.mxu0 %v178
    %v200 = vpop.f32.mrf.mxu0
    %v201 = vadd.f32 %v175, %v200
    %202 = vmatmul.f32.gmra.mxu0 %v181
    %v203 = vpop.f32.mrf.mxu0
    %v204 = vadd.f32 %v175, %v203
    %205 = vdwg.mxu0
    %v206 = vmul.f32 %v201, 0.35355338
    %v207 = vmul.f32 %v204, 0.35355338
    %209 = vrot.lane.b32.xlu0 %v201, 96
    %v210 = vpop.permute.xlu0 %209
    %vm211 = vcmask 64512
    %v213 = vsel %vm211, %v206, 0
    %v215 = vsel %vm211, %v210, 0
    %217 = vmatpush.xpose.msra.mxu0 0.0
    %218 = vmatpush.xpose.msra.mxu0 0.0
    %219 = vmatpush.xpose.msra.mxu0 0.0
    %220 = vmatpush.xpose.msra.mxu0 0.0
    %221 = vmatpush.xpose.msra.mxu0 0.0
    %222 = vmatpush.xpose.msra.mxu0 0.0
    %223 = vmatpush.xpose.msra.mxu0 0.0
    %224 = vmatpush.xpose.msra.mxu0 0.0
    %225 = vmatpush.xpose.msra.mxu0 0.0
    %226 = vmatpush.xpose.msra.mxu0 0.0
    %227 = vmatpush.xpose.msra.mxu0 0.0
    %228 = vmatpush.xpose.msra.mxu0 0.0
    %229 = vmatpush.xpose.msra.mxu0 0.0
    %230 = vmatpush.xpose.msra.mxu0 0.0
    %231 = vmatpush.xpose.msra.mxu0 0.0
    %232 = vmatpush.xpose.msra.mxu0 %v215
    %233 = vmatmul.f32.gmra.mxu0 %v213
    %v234 = vpop.f32.mrf.mxu0
    %v235 = vadd.f32 %v104, %v234
    %236 = vdwg.mxu0
    %238 = vrot.lane.b32.xlu0 %v204, 96
    %v239 = vpop.permute.xlu0 %238
    %v241 = vsel %vm211, %v207, 0
    %v243 = vsel %vm211, %v239, 0
    %245 = vmatpush.xpose.msra.mxu0 0.0
    %246 = vmatpush.xpose.msra.mxu0 0.0
    %247 = vmatpush.xpose.msra.mxu0 0.0
    %248 = vmatpush.xpose.msra.mxu0 0.0
    %249 = vmatpush.xpose.msra.mxu0 0.0
    %250 = vmatpush.xpose.msra.mxu0 0.0
    %251 = vmatpush.xpose.msra.mxu0 0.0
    %252 = vmatpush.xpose.msra.mxu0 0.0
    %253 = vmatpush.xpose.msra.mxu0 0.0
    %254 = vmatpush.xpose.msra.mxu0 0.0
    %255 = vmatpush.xpose.msra.mxu0 0.0
    %256 = vmatpush.xpose.msra.mxu0 0.0
    %257 = vmatpush.xpose.msra.mxu0 0.0
    %258 = vmatpush.xpose.msra.mxu0 0.0
    %259 = vmatpush.xpose.msra.mxu0 0.0
    %260 = vmatpush.xpose.msra.mxu0 %v243
    %261 = vmatmul.f32.gmra.mxu0 %v241
    %v262 = vpop.f32.mrf.mxu0
    %v263 = vadd.f32 %v104, %v262
    %264 = vdwg.mxu0
    %v265 = vsel %vm211, %v235, -inf
    %266 = vmax.xlane.f32.xlu0 %v265
    %v267 = vpop.xlane.xlu0 %266
    %v268 = vsel %vm211, %v263, -inf
    %269 = vmax.xlane.f32.xlu0 %v268
    %v270 = vpop.xlane.xlu0 %269
    %v271 = vsub.f32 %v235, %v267
    %v272 = vsub.f32 %v263, %v270
    %v273 = vmul.f32 %v271, 1.442695
    %v274 = vpow.pop %v273
    %v275 = vmul.f32 %v272, 1.442695
    %v276 = vpow.pop %v275
    %v277 = vsel %vm211, %v274, 0.0
    %278 = vadd.xlane.f32.xlu0 %v277
    %v279 = vpop.xlane.xlu0 %278
    %v280 = vsel %vm211, %v276, 0.0
    %281 = vadd.xlane.f32.xlu0 %v280
    %v282 = vpop.xlane.xlu0 %281
    %v283 = vrcp.pop %v279
    %v284 = vrcp.pop %v282
    %v285 = vmul.f32 %v274, %v283
    %v286 = vmul.f32 %v276, %v284
    %287 = vrot.lane.b32.xlu0 %v201, 64
    %v288 = vpop.permute.xlu0 %287
    %v291 = vsel %vm211, %v285, 0
    %293 = vmatpush.msra.mxu0 0.0
    %294 = vmatpush.msra.mxu0 0.0
    %295 = vmatpush.msra.mxu0 0.0
    %296 = vmatpush.msra.mxu0 0.0
    %297 = vmatpush.msra.mxu0 0.0
    %298 = vmatpush.msra.mxu0 0.0
    %299 = vmatpush.msra.mxu0 0.0
    %300 = vmatpush.msra.mxu0 0.0
    %301 = vmatpush.msra.mxu0 0.0
    %302 = vmatpush.msra.mxu0 0.0
    %303 = vmatpush.msra.mxu0 0.0
    %304 = vmatpush.msra.mxu0 0.0
    %305 = vmatpush.msra.mxu0 0.0
    %306 = vmatpush.msra.mxu0 0.0
    %307 = vmatpush.msra.mxu0 0.0
    %308 = vmatpush.msra.mxu0 %v288
    %309 = vmatmul.f32.gmra.mxu0 %v291
    %v310 = vpop.f32.mrf.mxu0
    %v311 = vadd.f32 0.0, %v310
    %312 = vdwg.mxu0
    %313 = vrot.lane.b32.xlu0 %v204, 64
    %v314 = vpop.permute.xlu0 %313
    %v317 = vsel %vm211, %v286, 0
    %319 = vmatpush.msra.mxu0 0.0
    %320 = vmatpush.msra.mxu0 0.0
    %321 = vmatpush.msra.mxu0 0.0
    %322 = vmatpush.msra.mxu0 0.0
    %323 = vmatpush.msra.mxu0 0.0
    %324 = vmatpush.msra.mxu0 0.0
    %325 = vmatpush.msra.mxu0 0.0
    %326 = vmatpush.msra.mxu0 0.0
    %327 = vmatpush.msra.mxu0 0.0
    %328 = vmatpush.msra.mxu0 0.0
    %329 = vmatpush.msra.mxu0 0.0
    %330 = vmatpush.msra.mxu0 0.0
    %331 = vmatpush.msra.mxu0 0.0
    %332 = vmatpush.msra.mxu0 0.0
    %333 = vmatpush.msra.mxu0 0.0
    %334 = vmatpush.msra.mxu0 %v314
    %335 = vmatmul.f32.gmra.mxu0 %v317
    %v336 = vpop.f32.mrf.mxu0
    %v337 = vadd.f32 0.0, %v336
    %338 = vdwg.mxu0
    %339 = vst.msk [vmem:[#allocation2] sm:$0xff] %vm211, %v311
    %340 = vst.msk [vmem:[#allocation2 + $0x8] sm:$0xff] %vm211, %v337
    %341 = vrot.lane.b32.xlu0 %v206, 120
    %v342 = vpop.permute.xlu0 %341
    %343 = vrot.lane.b32.xlu0 %v201, 88
    %v344 = vpop.permute.xlu0 %343
    %v345 = vsel %vm211, %v342, 0
    %v347 = vsel %vm211, %v344, 0
    %349 = vmatpush.xpose.msra.mxu0 0.0
    %350 = vmatpush.xpose.msra.mxu0 0.0
    %351 = vmatpush.xpose.msra.mxu0 0.0
    %352 = vmatpush.xpose.msra.mxu0 0.0
    %353 = vmatpush.xpose.msra.mxu0 0.0
    %354 = vmatpush.xpose.msra.mxu0 0.0
    %355 = vmatpush.xpose.msra.mxu0 0.0
    %356 = vmatpush.xpose.msra.mxu0 0.0
    %357 = vmatpush.xpose.msra.mxu0 0.0
    %358 = vmatpush.xpose.msra.mxu0 0.0
    %359 = vmatpush.xpose.msra.mxu0 0.0
    %360 = vmatpush.xpose.msra.mxu0 0.0
    %361 = vmatpush.xpose.msra.mxu0 0.0
    %362 = vmatpush.xpose.msra.mxu0 0.0
    %363 = vmatpush.xpose.msra.mxu0 0.0
    %364 = vmatpush.xpose.msra.mxu0 %v347
    %365 = vmatmul.f32.gmra.mxu0 %v345
    %v366 = vpop.f32.mrf.mxu0
    %v367 = vadd.f32 %v104, %v366
    %368 = vdwg.mxu0
    %369 = vrot.lane.b32.xlu0 %v207, 120
    %v370 = vpop.permute.xlu0 %369
    %371 = vrot.lane.b32.xlu0 %v204, 88
    %v372 = vpop.permute.xlu0 %371
    %v373 = vsel %vm211, %v370, 0
    %v375 = vsel %vm211, %v372, 0
    %377 = vmatpush.xpose.msra.mxu0 0.0
    %378 = vmatpush.xpose.msra.mxu0 0.0
    %379 = vmatpush.xpose.msra.mxu0 0.0
    %380 = vmatpush.xpose.msra.mxu0 0.0
    %381 = vmatpush.xpose.msra.mxu0 0.0
    %382 = vmatpush.xpose.msra.mxu0 0.0
    %383 = vmatpush.xpose.msra.mxu0 0.0
    %384 = vmatpush.xpose.msra.mxu0 0.0
    %385 = vmatpush.xpose.msra.mxu0 0.0
    %386 = vmatpush.xpose.msra.mxu0 0.0
    %387 = vmatpush.xpose.msra.mxu0 0.0
    %388 = vmatpush.xpose.msra.mxu0 0.0
    %389 = vmatpush.xpose.msra.mxu0 0.0
    %390 = vmatpush.xpose.msra.mxu0 0.0
    %391 = vmatpush.xpose.msra.mxu0 0.0
    %392 = vmatpush.xpose.msra.mxu0 %v375
    %393 = vmatmul.f32.gmra.mxu0 %v373
    %v394 = vpop.f32.mrf.mxu0
    %v395 = vadd.f32 %v104, %v394
    %396 = vdwg.mxu0
    %v397 = vsel %vm211, %v367, -inf
    %398 = vmax.xlane.f32.xlu0 %v397
    %v399 = vpop.xlane.xlu0 %398
    %v400 = vsel %vm211, %v395, -inf
    %401 = vmax.xlane.f32.xlu0 %v400
    %v402 = vpop.xlane.xlu0 %401
    %v403 = vsub.f32 %v367, %v399
    %v404 = vsub.f32 %v395, %v402
    %v405 = vmul.f32 %v403, 1.442695
    %v406 = vpow.pop %v405
    %v407 = vmul.f32 %v404, 1.442695
    %v408 = vpow.pop %v407
    %v409 = vsel %vm211, %v406, 0.0
    %410 = vadd.xlane.f32.xlu0 %v409
    %v411 = vpop.xlane.xlu0 %410
    %v412 = vsel %vm211, %v408, 0.0
    %413 = vadd.xlane.f32.xlu0 %v412
    %v414 = vpop.xlane.xlu0 %413
    %v415 = vrcp.pop %v411
    %v416 = vrcp.pop %v414
    %v417 = vmul.f32 %v406, %v415
    %v418 = vmul.f32 %v408, %v416
    %419 = vrot.lane.b32.xlu0 %v201, 56
    %v420 = vpop.permute.xlu0 %419
    %v423 = vsel %vm211, %v417, 0
    %425 = vmatpush.msra.mxu0 0.0
    %426 = vmatpush.msra.mxu0 0.0
    %427 = vmatpush.msra.mxu0 0.0
    %428 = vmatpush.msra.mxu0 0.0
    %429 = vmatpush.msra.mxu0 0.0
    %430 = vmatpush.msra.mxu0 0.0
    %431 = vmatpush.msra.mxu0 0.0
    %432 = vmatpush.msra.mxu0 0.0
    %433 = vmatpush.msra.mxu0 0.0
    %434 = vmatpush.msra.mxu0 0.0
    %435 = vmatpush.msra.mxu0 0.0
    %436 = vmatpush.msra.mxu0 0.0
    %437 = vmatpush.msra.mxu0 0.0
    %438 = vmatpush.msra.mxu0 0.0
    %439 = vmatpush.msra.mxu0 0.0
    %440 = vmatpush.msra.mxu0 %v420
    %441 = vmatmul.f32.gmra.mxu0 %v423
    %v442 = vpop.f32.mrf.mxu0
    %v443 = vadd.f32 0.0, %v442
    %444 = vdwg.mxu0
    %445 = vrot.lane.b32.xlu0 %v204, 56
    %v446 = vpop.permute.xlu0 %445
    %v449 = vsel %vm211, %v418, 0
    %451 = vmatpush.msra.mxu0 0.0
    %452 = vmatpush.msra.mxu0 0.0
    %453 = vmatpush.msra.mxu0 0.0
    %454 = vmatpush.msra.mxu0 0.0
    %455 = vmatpush.msra.mxu0 0.0
    %456 = vmatpush.msra.mxu0 0.0
    %457 = vmatpush.msra.mxu0 0.0
    %458 = vmatpush.msra.mxu0 0.0
    %459 = vmatpush.msra.mxu0 0.0
    %460 = vmatpush.msra.mxu0 0.0
    %461 = vmatpush.msra.mxu0 0.0
    %462 = vmatpush.msra.mxu0 0.0
    %463 = vmatpush.msra.mxu0 0.0
    %464 = vmatpush.msra.mxu0 0.0
    %465 = vmatpush.msra.mxu0 0.0
    %466 = vmatpush.msra.mxu0 %v446
    %467 = vmatmul.f32.gmra.mxu0 %v449
    %v468 = vpop.f32.mrf.mxu0
    %v469 = vadd.f32 0.0, %v468
    %470 = vdwg.mxu0
    %473 = vrot.lane.b32.xlu0 %v443, 8
    %v474 = vpop.permute.xlu0 %473
    %475 = vrot.lane.b32.xlu0 %v469, 8
    %v476 = vpop.permute.xlu0 %475
    %vm479 = vcmask 130112
    %480 = vst.msk [vmem:[#allocation2] sm:$0xff] %vm479, %v474
    %481 = vst.msk [vmem:[#allocation2 + $0x8] sm:$0xff] %vm479, %v476
    %482 = vrot.lane.b32.xlu0 %v206, 112
    %v483 = vpop.permute.xlu0 %482
    %484 = vrot.lane.b32.xlu0 %v201, 80
    %v485 = vpop.permute.xlu0 %484
    %v486 = vsel %vm211, %v483, 0
    %v488 = vsel %vm211, %v485, 0
    %490 = vmatpush.xpose.msra.mxu0 0.0
    %491 = vmatpush.xpose.msra.mxu0 0.0
    %492 = vmatpush.xpose.msra.mxu0 0.0
    %493 = vmatpush.xpose.msra.mxu0 0.0
    %494 = vmatpush.xpose.msra.mxu0 0.0
    %495 = vmatpush.xpose.msra.mxu0 0.0
    %496 = vmatpush.xpose.msra.mxu0 0.0
    %497 = vmatpush.xpose.msra.mxu0 0.0
    %498 = vmatpush.xpose.msra.mxu0 0.0
    %499 = vmatpush.xpose.msra.mxu0 0.0
    %500 = vmatpush.xpose.msra.mxu0 0.0
    %501 = vmatpush.xpose.msra.mxu0 0.0
    %502 = vmatpush.xpose.msra.mxu0 0.0
    %503 = vmatpush.xpose.msra.mxu0 0.0
    %504 = vmatpush.xpose.msra.mxu0 0.0
    %505 = vmatpush.xpose.msra.mxu0 %v488
    %506 = vmatmul.f32.gmra.mxu0 %v486
    %v507 = vpop.f32.mrf.mxu0
    %v508 = vadd.f32 %v104, %v507
    %509 = vdwg.mxu0
    %510 = vrot.lane.b32.xlu0 %v207, 112
    %v511 = vpop.permute.xlu0 %510
    %512 = vrot.lane.b32.xlu0 %v204, 80
    %v513 = vpop.permute.xlu0 %512
    %v514 = vsel %vm211, %v511, 0
    %v516 = vsel %vm211, %v513, 0
    %518 = vmatpush.xpose.msra.mxu0 0.0
    %519 = vmatpush.xpose.msra.mxu0 0.0
    %520 = vmatpush.xpose.msra.mxu0 0.0
    %521 = vmatpush.xpose.msra.mxu0 0.0
    %522 = vmatpush.xpose.msra.mxu0 0.0
    %523 = vmatpush.xpose.msra.mxu0 0.0
    %524 = vmatpush.xpose.msra.mxu0 0.0
    %525 = vmatpush.xpose.msra.mxu0 0.0
    %526 = vmatpush.xpose.msra.mxu0 0.0
    %527 = vmatpush.xpose.msra.mxu0 0.0
    %528 = vmatpush.xpose.msra.mxu0 0.0
    %529 = vmatpush.xpose.msra.mxu0 0.0
    %530 = vmatpush.xpose.msra.mxu0 0.0
    %531 = vmatpush.xpose.msra.mxu0 0.0
    %532 = vmatpush.xpose.msra.mxu0 0.0
    %533 = vmatpush.xpose.msra.mxu0 %v516
    %534 = vmatmul.f32.gmra.mxu0 %v514
    %v535 = vpop.f32.mrf.mxu0
    %v536 = vadd.f32 %v104, %v535
    %537 = vdwg.mxu0
    %v538 = vsel %vm211, %v508, -inf
    %539 = vmax.xlane.f32.xlu0 %v538
    %v540 = vpop.xlane.xlu0 %539
    %v541 = vsel %vm211, %v536, -inf
    %542 = vmax.xlane.f32.xlu0 %v541
    %v543 = vpop.xlane.xlu0 %542
    %v544 = vsub.f32 %v508, %v540
    %v545 = vsub.f32 %v536, %v543
    %v546 = vmul.f32 %v544, 1.442695
    %v547 = vpow.pop %v546
    %v548 = vmul.f32 %v545, 1.442695
    %v549 = vpow.pop %v548
    %v550 = vsel %vm211, %v547, 0.0
    %551 = vadd.xlane.f32.xlu0 %v550
    %v552 = vpop.xlane.xlu0 %551
    %v553 = vsel %vm211, %v549, 0.0
    %554 = vadd.xlane.f32.xlu0 %v553
    %v555 = vpop.xlane.xlu0 %554
    %v556 = vrcp.pop %v552
    %v557 = vrcp.pop %v555
    %v558 = vmul.f32 %v547, %v556
    %v559 = vmul.f32 %v549, %v557
    %560 = vrot.lane.b32.xlu0 %v201, 48
    %v561 = vpop.permute.xlu0 %560
    %v564 = vsel %vm211, %v558, 0
    %566 = vmatpush.msra.mxu0 0.0
    %567 = vmatpush.msra.mxu0 0.0
    %568 = vmatpush.msra.mxu0 0.0
    %569 = vmatpush.msra.mxu0 0.0
    %570 = vmatpush.msra.mxu0 0.0
    %571 = vmatpush.msra.mxu0 0.0
    %572 = vmatpush.msra.mxu0 0.0
    %573 = vmatpush.msra.mxu0 0.0
    %574 = vmatpush.msra.mxu0 0.0
    %575 = vmatpush.msra.mxu0 0.0
    %576 = vmatpush.msra.mxu0 0.0
    %577 = vmatpush.msra.mxu0 0.0
    %578 = vmatpush.msra.mxu0 0.0
    %579 = vmatpush.msra.mxu0 0.0
    %580 = vmatpush.msra.mxu0 0.0
    %581 = vmatpush.msra.mxu0 %v561
    %582 = vmatmul.f32.gmra.mxu0 %v564
    %v583 = vpop.f32.mrf.mxu0
    %v584 = vadd.f32 0.0, %v583
    %585 = vdwg.mxu0
    %586 = vrot.lane.b32.xlu0 %v204, 48
    %v587 = vpop.permute.xlu0 %586
    %v590 = vsel %vm211, %v559, 0
    %592 = vmatpush.msra.mxu0 0.0
    %593 = vmatpush.msra.mxu0 0.0
    %594 = vmatpush.msra.mxu0 0.0
    %595 = vmatpush.msra.mxu0 0.0
    %596 = vmatpush.msra.mxu0 0.0
    %597 = vmatpush.msra.mxu0 0.0
    %598 = vmatpush.msra.mxu0 0.0
    %599 = vmatpush.msra.mxu0 0.0
    %600 = vmatpush.msra.mxu0 0.0
    %601 = vmatpush.msra.mxu0 0.0
    %602 = vmatpush.msra.mxu0 0.0
    %603 = vmatpush.msra.mxu0 0.0
    %604 = vmatpush.msra.mxu0 0.0
    %605 = vmatpush.msra.mxu0 0.0
    %606 = vmatpush.msra.mxu0 0.0
    %607 = vmatpush.msra.mxu0 %v587
    %608 = vmatmul.f32.gmra.mxu0 %v590
    %v609 = vpop.f32.mrf.mxu0
    %v610 = vadd.f32 0.0, %v609
    %611 = vdwg.mxu0
    %614 = vrot.lane.b32.xlu0 %v584, 16
    %v615 = vpop.permute.xlu0 %614
    %616 = vrot.lane.b32.xlu0 %v610, 16
    %v617 = vpop.permute.xlu0 %616
    %vm620 = vcmask 195712
    %621 = vst.msk [vmem:[#allocation2] sm:$0xff] %vm620, %v615
    %622 = vst.msk [vmem:[#allocation2 + $0x8] sm:$0xff] %vm620, %v617
    %623 = vrot.lane.b32.xlu0 %v206, 104
    %v624 = vpop.permute.xlu0 %623
    %625 = vrot.lane.b32.xlu0 %v201, 72
    %v626 = vpop.permute.xlu0 %625
    %v627 = vsel %vm211, %v624, 0
    %v629 = vsel %vm211, %v626, 0
    %631 = vmatpush.xpose.msra.mxu0 0.0
    %632 = vmatpush.xpose.msra.mxu0 0.0
    %633 = vmatpush.xpose.msra.mxu0 0.0
    %634 = vmatpush.xpose.msra.mxu0 0.0
    %635 = vmatpush.xpose.msra.mxu0 0.0
    %636 = vmatpush.xpose.msra.mxu0 0.0
    %637 = vmatpush.xpose.msra.mxu0 0.0
    %638 = vmatpush.xpose.msra.mxu0 0.0
    %639 = vmatpush.xpose.msra.mxu0 0.0
    %640 = vmatpush.xpose.msra.mxu0 0.0
    %641 = vmatpush.xpose.msra.mxu0 0.0
    %642 = vmatpush.xpose.msra.mxu0 0.0
    %643 = vmatpush.xpose.msra.mxu0 0.0
    %644 = vmatpush.xpose.msra.mxu0 0.0
    %645 = vmatpush.xpose.msra.mxu0 0.0
    %646 = vmatpush.xpose.msra.mxu0 %v629
    %647 = vmatmul.f32.gmra.mxu0 %v627
    %v648 = vpop.f32.mrf.mxu0
    %v649 = vadd.f32 %v104, %v648
    %650 = vdwg.mxu0
    %651 = vrot.lane.b32.xlu0 %v207, 104
    %v652 = vpop.permute.xlu0 %651
    %653 = vrot.lane.b32.xlu0 %v204, 72
    %v654 = vpop.permute.xlu0 %653
    %v655 = vsel %vm211, %v652, 0
    %v657 = vsel %vm211, %v654, 0
    %659 = vmatpush.xpose.msra.mxu0 0.0
    %660 = vmatpush.xpose.msra.mxu0 0.0
    %661 = vmatpush.xpose.msra.mxu0 0.0
    %662 = vmatpush.xpose.msra.mxu0 0.0
    %663 = vmatpush.xpose.msra.mxu0 0.0
    %664 = vmatpush.xpose.msra.mxu0 0.0
    %665 = vmatpush.xpose.msra.mxu0 0.0
    %666 = vmatpush.xpose.msra.mxu0 0.0
    %667 = vmatpush.xpose.msra.mxu0 0.0
    %668 = vmatpush.xpose.msra.mxu0 0.0
    %669 = vmatpush.xpose.msra.mxu0 0.0
    %670 = vmatpush.xpose.msra.mxu0 0.0
    %671 = vmatpush.xpose.msra.mxu0 0.0
    %672 = vmatpush.xpose.msra.mxu0 0.0
    %673 = vmatpush.xpose.msra.mxu0 0.0
    %674 = vmatpush.xpose.msra.mxu0 %v657
    %675 = vmatmul.f32.gmra.mxu0 %v655
    %v676 = vpop.f32.mrf.mxu0
    %v677 = vadd.f32 %v104, %v676
    %678 = vdwg.mxu0
    %v679 = vsel %vm211, %v649, -inf
    %680 = vmax.xlane.f32.xlu0 %v679
    %v681 = vpop.xlane.xlu0 %680
    %v682 = vsel %vm211, %v677, -inf
    %683 = vmax.xlane.f32.xlu0 %v682
    %v684 = vpop.xlane.xlu0 %683
    %v685 = vsub.f32 %v649, %v681
    %v686 = vsub.f32 %v677, %v684
    %v687 = vmul.f32 %v685, 1.442695
    %v688 = vpow.pop %v687
    %v689 = vmul.f32 %v686, 1.442695
    %v690 = vpow.pop %v689
    %v691 = vsel %vm211, %v688, 0.0
    %692 = vadd.xlane.f32.xlu0 %v691
    %v693 = vpop.xlane.xlu0 %692
    %v694 = vsel %vm211, %v690, 0.0
    %695 = vadd.xlane.f32.xlu0 %v694
    %v696 = vpop.xlane.xlu0 %695
    %v697 = vrcp.pop %v693
    %v698 = vrcp.pop %v696
    %v699 = vmul.f32 %v688, %v697
    %v700 = vmul.f32 %v690, %v698
    %701 = vrot.lane.b32.xlu0 %v201, 40
    %v702 = vpop.permute.xlu0 %701
    %v705 = vsel %vm211, %v699, 0
    %707 = vmatpush.msra.mxu0 0.0
    %708 = vmatpush.msra.mxu0 0.0
    %709 = vmatpush.msra.mxu0 0.0
    %710 = vmatpush.msra.mxu0 0.0
    %711 = vmatpush.msra.mxu0 0.0
    %712 = vmatpush.msra.mxu0 0.0
    %713 = vmatpush.msra.mxu0 0.0
    %714 = vmatpush.msra.mxu0 0.0
    %715 = vmatpush.msra.mxu0 0.0
    %716 = vmatpush.msra.mxu0 0.0
    %717 = vmatpush.msra.mxu0 0.0
    %718 = vmatpush.msra.mxu0 0.0
    %719 = vmatpush.msra.mxu0 0.0
    %720 = vmatpush.msra.mxu0 0.0
    %721 = vmatpush.msra.mxu0 0.0
    %722 = vmatpush.msra.mxu0 %v702
    %723 = vmatmul.f32.gmra.mxu0 %v705
    %v724 = vpop.f32.mrf.mxu0
    %v725 = vadd.f32 0.0, %v724
    %726 = vdwg.mxu0
    %727 = vrot.lane.b32.xlu0 %v204, 40
    %v728 = vpop.permute.xlu0 %727
    %v731 = vsel %vm211, %v700, 0
    %733 = vmatpush.msra.mxu0 0.0
    %734 = vmatpush.msra.mxu0 0.0
    %735 = vmatpush.msra.mxu0 0.0
    %736 = vmatpush.msra.mxu0 0.0
    %737 = vmatpush.msra.mxu0 0.0
    %738 = vmatpush.msra.mxu0 0.0
    %739 = vmatpush.msra.mxu0 0.0
    %740 = vmatpush.msra.mxu0 0.0
    %741 = vmatpush.msra.mxu0 0.0
    %742 = vmatpush.msra.mxu0 0.0
    %743 = vmatpush.msra.mxu0 0.0
    %744 = vmatpush.msra.mxu0 0.0
    %745 = vmatpush.msra.mxu0 0.0
    %746 = vmatpush.msra.mxu0 0.0
    %747 = vmatpush.msra.mxu0 0.0
    %748 = vmatpush.msra.mxu0 %v728
    %749 = vmatmul.f32.gmra.mxu0 %v731
    %v750 = vpop.f32.mrf.mxu0
    %v751 = vadd.f32 0.0, %v750
    %752 = vdwg.mxu0
    %755 = vrot.lane.b32.xlu0 %v725, 24
    %v756 = vpop.permute.xlu0 %755
    %757 = vrot.lane.b32.xlu0 %v751, 24
    %v758 = vpop.permute.xlu0 %757
    %vm761 = vcmask 261312
    %762 = vst.msk [vmem:[#allocation2] sm:$0xff] %vm761, %v756
    %763 = vst.msk [vmem:[#allocation2 + $0x8] sm:$0xff] %vm761, %v758
    %v764 = vld [vmem:[#allocation2] sm:$0xff]
    %v765 = vld [vmem:[#allocation2 + $0x8] sm:$0xff]
    %v766 = vld [vmem:[%s7] sm:$0xff]
    %v767 = vld [vmem:[%s7 + $0x8] sm:$0xff]
    %v768 = vld [vmem:[%s7 + $0x10] sm:$0xff]
    %v769 = vld [vmem:[%s7 + $0x18] sm:$0xff]
    %v770 = vld [vmem:[%s8] sm:$0x1]
    %v772 = vperm.slane %v770, 0
    %v775 = vsel %vm107, %v764, 0
    %v778 = vsel %vm107, %v765, 0
    %780 = vmatpush.msra.mxu0 0.0
    %781 = vmatpush.msra.mxu0 0.0
    %782 = vmatpush.msra.mxu0 0.0
    %783 = vmatpush.msra.mxu0 0.0
    %784 = vmatpush.msra.mxu0 0.0
    %785 = vmatpush.msra.mxu0 0.0
    %786 = vmatpush.msra.mxu0 0.0
    %787 = vmatpush.msra.mxu0 0.0
    %788 = vmatpush.msra.mxu0 0.0
    %789 = vmatpush.msra.mxu0 0.0
    %790 = vmatpush.msra.mxu0 0.0
    %791 = vmatpush.msra.mxu0 0.0
    %792 = vmatpush.msra.mxu0 %v769
    %793 = vmatpush.msra.mxu0 %v768
    %794 = vmatpush.msra.mxu0 %v767
    %795 = vmatpush.msra.mxu0 %v766
    %796 = vmatmul.f32.gmra.mxu0 %v775
    %v797 = vpop.f32.mrf.mxu0
    %v798 = vadd.f32 %v772, %v797
    %799 = vmatmul.f32.gmra.mxu0 %v778
    %v800 = vpop.f32.mrf.mxu0
    %v801 = vadd.f32 %v772, %v800
    %802 = vdwg.mxu0
    %v803 = vadd.f32 %v94, %v798
    %v804 = vadd.f32 %v97, %v801
    %v805 = vld [vmem:[%s9] sm:$0x1]
    %v806 = vld [vmem:[%s10] sm:$0x1]
    %v807 = vsel %vm107, %v803, 0.0
    %808 = vadd.xlane.f32.xlu0 %v807
    %v809 = vpop.xlane.xlu0 %808
    %v810 = vsel %vm107, %v804, 0.0
    %811 = vadd.xlane.f32.xlu0 %v810
    %v812 = vpop.xlane.xlu0 %811
    %v813 = vmul.f32 %v809, %v120
    %v814 = vmul.f32 %v812, %v120
    %v815 = vsub.f32 %v803, %v813
    %v816 = vsub.f32 %v804, %v814
    %v817 = vmul.f32 %v815, %v815
    %v818 = vmul.f32 %v816, %v816
    %v819 = vsel %vm107, %v817, 0.0
    %820 = vadd.xlane.f32.xlu0 %v819
    %v821 = vpop.xlane.xlu0 %820
    %v822 = vsel %vm107, %v818, 0.0
    %823 = vadd.xlane.f32.xlu0 %v822
    %v824 = vpop.xlane.xlu0 %823
    %v825 = vmul.f32 %v821, %v120
    %v826 = vmul.f32 %v824, %v120
    %v827 = vadd.f32 %v825, 1e-05
    %v828 = vadd.f32 %v826, 1e-05
    %v829 = vrsqrt.pop %v827
    %v830 = vmul.f32 %v829, %v827
    %v831 = vmul.f32 %v830, %v829
    %v832 = vmul.f32 0.5, %v831
    %v833 = vsub.f32 1.5, %v832
    %v834 = vmul.f32 %v829, %v833
    %vm835 = vweird.f32 %v827
    %vm836 = vweird.f32 %v829
    %vm837 = vmor %vm835, %vm836
    %v838 = vsel %vm837, %v829, %v834
    %v839 = vrsqrt.pop %v828
    %v840 = vmul.f32 %v839, %v828
    %v841 = vmul.f32 %v840, %v839
    %v842 = vmul.f32 0.5, %v841
    %v843 = vsub.f32 1.5, %v842
    %v844 = vmul.f32 %v839, %v843
    %vm845 = vweird.f32 %v828
    %vm846 = vweird.f32 %v839
    %vm847 = vmor %vm845, %vm846
    %v848 = vsel %vm847, %v839, %v844
    %v849 = vmul.f32 %v815, %v838
    %v850 = vmul.f32 %v816, %v848
    %v852 = vperm.slane %v805, 0
    %v854 = vmul.f32 %v849, %v852
    %v855 = vmul.f32 %v850, %v852
    %v857 = vperm.slane %v806, 0
    %v859 = vadd.f32 %v854, %v857
    %v860 = vadd.f32 %v855, %v857
    %v861 = vld [vmem:[%s11] sm:$0xff]
    %v862 = vld [vmem:[%s11 + $0x8] sm:$0xff]
    %v863 = vld [vmem:[%s11 + $0x10] sm:$0xff]
    %v864 = vld [vmem:[%s11 + $0x18] sm:$0xff]
    %v865 = vld [vmem:[%s12] sm:$0x1]
    %v867 = vperm.slane %v865, 0
    %v870 = vsel %vm107, %v859, 0
    %v873 = vsel %vm107, %v860, 0
    %875 = vmatpush.msra.mxu0 0.0
    %876 = vmatpush.msra.mxu0 0.0
    %877 = vmatpush.msra.mxu0 0.0
    %878 = vmatpush.msra.mxu0 0.0
    %879 = vmatpush.msra.mxu0 0.0
    %880 = vmatpush.msra.mxu0 0.0
    %881 = vmatpush.msra.mxu0 0.0
    %882 = vmatpush.msra.mxu0 0.0
    %883 = vmatpush.msra.mxu0 0.0
    %884 = vmatpush.msra.mxu0 0.0
    %885 = vmatpush.msra.mxu0 0.0
    %886 = vmatpush.msra.mxu0 0.0
    %887 = vmatpush.msra.mxu0 %v864
    %888 = vmatpush.msra.mxu0 %v863
    %889 = vmatpush.msra.mxu0 %v862
    %890 = vmatpush.msra.mxu0 %v861
    %891 = vmatmul.f32.gmra.mxu0 %v870
    %v892 = vpop.f32.mrf.mxu0
    %v893 = vadd.f32 %v867, %v892
    %894 = vmatmul.f32.gmra.mxu0 %v873
    %v895 = vpop.f32.mrf.mxu0
    %v896 = vadd.f32 %v867, %v895
    %897 = vdwg.mxu0
    %v898 = vmul.f32 %v893, 0.5
    %v899 = vmul.f32 %v896, 0.5
    %v900 = vmul.f32 %v893, 0.70710677
    %v901 = vmul.f32 %v896, 0.70710677
    %v902 = vmul.f32 %v900, %v900
    %v903 = vmin.f32 16.0, %v902
    %v904 = vmul.f32 %v903, 2.1237322e-06
    %v905 = vadd.f32 %v904, 0.00028619796
    %v906 = vmul.f32 %v903, %v905
    %v907 = vadd.f32 %v906, 0.0036580483
    %v908 = vmul.f32 %v903, %v907
    %v909 = vadd.f32 %v908, 0.05243302
    %v910 = vmul.f32 %v903, %v909
    %v911 = vadd.f32 %v910, 0.18741608
    %v912 = vmul.f32 %v903, %v911
    %v913 = vadd.f32 %v912, 1.1283791
    %v914 = vmul.f32 %v900, %v913
    %v915 = vmul.f32 %v903, 3.8918573e-05
    %v916 = vadd.f32 %v915, 0.001143296
    %v917 = vmul.f32 %v903, %v916
    %v918 = vadd.f32 %v917, 0.014752088
    %v919 = vmul.f32 %v903, %v918
    %v920 = vadd.f32 %v919, 0.112945676
    %v921 = vmul.f32 %v903, %v920
    %v922 = vadd.f32 %v921, 0.4994258
    %v923 = vmul.f32 %v903, %v922
    %v924 = vadd.f32 %v923, 1.0
    %v925 = vrcp.pop %v924
    %v926 = vmul.f32 %v924, %v925
    %v927 = vsub.f32 1.0, %v926
    %v928 = vmul.f32 %v925, %v927
    %v929 = vadd.f32 %v925, %v928
    %vm930 = vweird.f32 %v924
    %vm931 = vweird.f32 %v925
    %vm932 = vmor %vm930, %vm931
    %v933 = vsel %vm932, %v925, %v929
    %v934 = vand.u32 2147483647, %v924
    %vm935 = vcmp.eq.f32.partialorder %v934, 8.507059e+37
    %v936 = vand.u32 %v924, 2147483648
    %v937 = vor.u32 1.1754944e-38, %v936
    %v938 = vsel %vm935, %v937, %v933
    %v939 = vmul.f32 %v914, %v938
    %v940 = vmin.f32 %v939, 1.0
    %v941 = vmax.f32 %v940, -1.0
    %v942 = vmul.f32 %v901, %v901
    %v943 = vmin.f32 16.0, %v942
    %v944 = vmul.f32 %v943, 2.1237322e-06
    %v945 = vadd.f32 %v944, 0.00028619796
    %v946 = vmul.f32 %v943, %v945
    %v947 = vadd.f32 %v946, 0.0036580483
    %v948 = vmul.f32 %v943, %v947
    %v949 = vadd.f32 %v948, 0.05243302
    %v950 = vmul.f32 %v943, %v949
    %v951 = vadd.f32 %v950, 0.18741608
    %v952 = vmul.f32 %v943, %v951
    %v953 = vadd.f32 %v952, 1.1283791
    %v954 = vmul.f32 %v901, %v953
    %v955 = vmul.f32 %v943, 3.8918573e-05
    %v956 = vadd.f32 %v955, 0.001143296
    %v957 = vmul.f32 %v943, %v956
    %v958 = vadd.f32 %v957, 0.014752088
    %v959 = vmul.f32 %v943, %v958
    %v960 = vadd.f32 %v959, 0.112945676
    %v961 = vmul.f32 %v943, %v960
    %v962 = vadd.f32 %v961, 0.4994258
    %v963 = vmul.f32 %v943, %v962
    %v964 = vadd.f32 %v963, 1.0
    %v965 = vrcp.pop %v964
    %v966 = vmul.f32 %v964, %v965
    %v967 = vsub.f32 1.0, %v966
    %v968 = vmul.f32 %v965, %v967
    %v969 = vadd.f32 %v965, %v968
    %vm970 = vweird.f32 %v964
    %vm971 = vweird.f32 %v965
    %vm972 = vmor %vm970, %vm971
    %v973 = vsel %vm972, %v965, %v969
    %v974 = vand.u32 2147483647, %v964
    %vm975 = vcmp.eq.f32.partialorder %v974, 8.507059e+37
    %v976 = vand.u32 %v964, 2147483648
    %v977 = vor.u32 1.1754944e-38, %v976
    %v978 = vsel %vm975, %v977, %v973
    %v979 = vmul.f32 %v954, %v978
    %v980 = vmin.f32 %v979, 1.0
    %v981 = vmax.f32 %v980, -1.0
    %v982 = vadd.f32 %v941, 1.0
    %v983 = vadd.f32 %v981, 1.0
    %v984 = vmul.f32 %v898, %v982
    %v985 = vmul.f32 %v899, %v983
    %v986 = vld [vmem:[%s13] sm:$0xff]
    %v987 = vld [vmem:[%s13 + $0x8] sm:$0xff]
    %v988 = vld [vmem:[%s13 + $0x10] sm:$0xff]
    %v989 = vld [vmem:[%s13 + $0x18] sm:$0xff]
    %v990 = vld [vmem:[%s13 + $0x20] sm:$0xff]
    %v991 = vld [vmem:[%s13 + $0x28] sm:$0xff]
    %v992 = vld [vmem:[%s13 + $0x30] sm:$0xff]
    %v993 = vld [vmem:[%s13 + $0x38] sm:$0xff]
    %v994 = vld [vmem:[%s13 + $0x40] sm:$0xff]
    %v995 = vld [vmem:[%s13 + $0x48] sm:$0xff]
    %v996 = vld [vmem:[%s13 + $0x50] sm:$0xff]
    %v997 = vld [vmem:[%s13 + $0x58] sm:$0xff]
    %v998 = vld [vmem:[%s13 + $0x60] sm:$0xff]
    %v999 = vld [vmem:[%s13 + $0x68] sm:$0xff]
    %v1000 = vld [vmem:[%s13 + $0x70] sm:$0xff]
    %v1001 = vld [vmem:[%s13 + $0x78] sm:$0xff]
    %v1002 = vld [vmem:[%s14] sm:$0x1]
    %v1004 = vperm.slane %v1002, 0
    %1006 = vmatpush.msra.mxu0 %v1001
    %1007 = vmatpush.msra.mxu0 %v1000
    %1008 = vmatpush.msra.mxu0 %v999
    %1009 = vmatpush.msra.mxu0 %v998
    %1010 = vmatpush.msra.mxu0 %v997
    %1011 = vmatpush.msra.mxu0 %v996
    %1012 = vmatpush.msra.mxu0 %v995
    %1013 = vmatpush.msra.mxu0 %v994
    %1014 = vmatpush.msra.mxu0 %v993
    %1015 = vmatpush.msra.mxu0 %v992
    %1016 = vmatpush.msra.mxu0 %v991
    %1017 = vmatpush.msra.mxu0 %v990
    %1018 = vmatpush.msra.mxu0 %v989
    %1019 = vmatpush.msra.mxu0 %v988
    %1020 = vmatpush.msra.mxu0 %v987
    %1021 = vmatpush.msra.mxu0 %v986
    %1022 = vmatmul.f32.gmra.mxu0 %v984
    %v1023 = vpop.f32.mrf.mxu0
    %v1024 = vadd.f32 %v1004, %v1023
    %1025 = vmatmul.f32.gmra.mxu0 %v985
    %v1026 = vpop.f32.mrf.mxu0
    %v1027 = vadd.f32 %v1004, %v1026
    %1028 = vdwg.mxu0
    %v1029 = vadd.f32 %v803, %v1024
    %v1030 = vadd.f32 %v804, %v1027
    %s1031 = scalar_lea.vmem %s3, 1
    %v1032 = vld [vmem:[%s1031] sm:$0x1]
    %s1033 = scalar_lea.vmem %s4, 1
    %v1034 = vld [vmem:[%s1033] sm:$0x1]
    %v1035 = vsel %vm107, %v1029, 0.0
    %1036 = vadd.xlane.f32.xlu0 %v1035
    %v1037 = vpop.xlane.xlu0 %1036
    %v1038 = vsel %vm107, %v1030, 0.0
    %1039 = vadd.xlane.f32.xlu0 %v1038
    %v1040 = vpop.xlane.xlu0 %1039
    %v1041 = vmul.f32 %v1037, %v120
    %v1042 = vmul.f32 %v1040, %v120
    %v1043 = vsub.f32 %v1029, %v1041
    %v1044 = vsub.f32 %v1030, %v1042
    %v1045 = vmul.f32 %v1043, %v1043
    %v1046 = vmul.f32 %v1044, %v1044
    %v1047 = vsel %vm107, %v1045, 0.0
    %1048 = vadd.xlane.f32.xlu0 %v1047
    %v1049 = vpop.xlane.xlu0 %1048
    %v1050 = vsel %vm107, %v1046, 0.0
    %1051 = vadd.xlane.f32.xlu0 %v1050
    %v1052 = vpop.xlane.xlu0 %1051
    %v1053 = vmul.f32 %v1049, %v120
    %v1054 = vmul.f32 %v1052, %v120
    %v1055 = vadd.f32 %v1053, 1e-05
    %v1056 = vadd.f32 %v1054, 1e-05
    %v1057 = vrsqrt.pop %v1055
    %v1058 = vmul.f32 %v1057, %v1055
    %v1059 = vmul.f32 %v1058, %v1057
    %v1060 = vmul.f32 0.5, %v1059
    %v1061 = vsub.f32 1.5, %v1060
    %v1062 = vmul.f32 %v1057, %v1061
    %vm1063 = vweird.f32 %v1055
    %vm1064 = vweird.f32 %v1057
    %vm1065 = vmor %vm1063, %vm1064
    %v1066 = vsel %vm1065, %v1057, %v1062
    %v1067 = vrsqrt.pop %v1056
    %v1068 = vmul.f32 %v1067, %v1056
    %v1069 = vmul.f32 %v1068, %v1067
    %v1070 = vmul.f32 0.5, %v1069
    %v1071 = vsub.f32 1.5, %v1070
    %v1072 = vmul.f32 %v1067, %v1071
    %vm1073 = vweird.f32 %v1056
    %vm1074 = vweird.f32 %v1067
    %vm1075 = vmor %vm1073, %vm1074
    %v1076 = vsel %vm1075, %v1067, %v1072
    %v1077 = vmul.f32 %v1043, %v1066
    %v1078 = vmul.f32 %v1044, %v1076
    %v1080 = vperm.slane %v1032, 0
    %v1082 = vmul.f32 %v1077, %v1080
    %v1083 = vmul.f32 %v1078, %v1080
    %v1085 = vperm.slane %v1034, 0
    %v1087 = vadd.f32 %v1082, %v1085
    %v1088 = vadd.f32 %v1083, %v1085
    %s1089 = scalar_lea.vmem %s5, 32
    %v1090 = vld [vmem:[%s1089] sm:$0xff]
    %v1091 = vld [vmem:[%s1089 + $0x8] sm:$0xff]
    %v1092 = vld [vmem:[%s1089 + $0x10] sm:$0xff]
    %v1093 = vld [vmem:[%s1089 + $0x18] sm:$0xff]
    %s1094 = scalar_lea.vmem %s6, 1
    %v1095 = vld [vmem:[%s1094] sm:$0x1]
    %v1097 = vperm.slane %v1095, 0
    %v1100 = vsel %vm107, %v1087, 0
    %v1103 = vsel %vm107, %v1088, 0
    %1105 = vmatpush.msra.mxu0 0.0
    %1106 = vmatpush.msra.mxu0 0.0
    %1107 = vmatpush.msra.mxu0 0.0
    %1108 = vmatpush.msra.mxu0 0.0
    %1109 = vmatpush.msra.mxu0 0.0
    %1110 = vmatpush.msra.mxu0 0.0
    %1111 = vmatpush.msra.mxu0 0.0
    %1112 = vmatpush.msra.mxu0 0.0
    %1113 = vmatpush.msra.mxu0 0.0
    %1114 = vmatpush.msra.mxu0 0.0
    %1115 = vmatpush.msra.mxu0 0.0
    %1116 = vmatpush.msra.mxu0 0.0
    %1117 = vmatpush.msra.mxu0 %v1093
    %1118 = vmatpush.msra.mxu0 %v1092
    %1119 = vmatpush.msra.mxu0 %v1091
    %1120 = vmatpush.msra.mxu0 %v1090
    %1121 = vmatmul.f32.gmra.mxu0 %v1100
    %v1122 = vpop.f32.mrf.mxu0
    %v1123 = vadd.f32 %v1097, %v1122
    %1124 = vmatmul.f32.gmra.mxu0 %v1103
    %v1125 = vpop.f32.mrf.mxu0
    %v1126 = vadd.f32 %v1097, %v1125
    %1127 = vdwg.mxu0
    %v1128 = vmul.f32 %v1123, 0.35355338
    %v1129 = vmul.f32 %v1126, 0.35355338
    %1131 = vrot.lane.b32.xlu0 %v1123, 96
    %v1132 = vpop.permute.xlu0 %1131
    %v1134 = vsel %vm211, %v1128, 0
    %v1136 = vsel %vm211, %v1132, 0
    %1138 = vmatpush.xpose.msra.mxu0 0.0
    %1139 = vmatpush.xpose.msra.mxu0 0.0
    %1140 = vmatpush.xpose.msra.mxu0 0.0
    %1141 = vmatpush.xpose.msra.mxu0 0.0
    %1142 = vmatpush.xpose.msra.mxu0 0.0
    %1143 = vmatpush.xpose.msra.mxu0 0.0
    %1144 = vmatpush.xpose.msra.mxu0 0.0
    %1145 = vmatpush.xpose.msra.mxu0 0.0
    %1146 = vmatpush.xpose.msra.mxu0 0.0
    %1147 = vmatpush.xpose.msra.mxu0 0.0
    %1148 = vmatpush.xpose.msra.mxu0 0.0
    %1149 = vmatpush.xpose.msra.mxu0 0.0
    %1150 = vmatpush.xpose.msra.mxu0 0.0
    %1151 = vmatpush.xpose.msra.mxu0 0.0
    %1152 = vmatpush.xpose.msra.mxu0 0.0
    %1153 = vmatpush.xpose.msra.mxu0 %v1136
    %1154 = vmatmul.f32.gmra.mxu0 %v1134
    %v1155 = vpop.f32.mrf.mxu0
    %v1156 = vadd.f32 %v104, %v1155
    %1157 = vdwg.mxu0
    %1159 = vrot.lane.b32.xlu0 %v1126, 96
    %v1160 = vpop.permute.xlu0 %1159
    %v1162 = vsel %vm211, %v1129, 0
    %v1164 = vsel %vm211, %v1160, 0
    %1166 = vmatpush.xpose.msra.mxu0 0.0
    %1167 = vmatpush.xpose.msra.mxu0 0.0
    %1168 = vmatpush.xpose.msra.mxu0 0.0
    %1169 = vmatpush.xpose.msra.mxu0 0.0
    %1170 = vmatpush.xpose.msra.mxu0 0.0
    %1171 = vmatpush.xpose.msra.mxu0 0.0
    %1172 = vmatpush.xpose.msra.mxu0 0.0
    %1173 = vmatpush.xpose.msra.mxu0 0.0
    %1174 = vmatpush.xpose.msra.mxu0 0.0
    %1175 = vmatpush.xpose.msra.mxu0 0.0
    %1176 = vmatpush.xpose.msra.mxu0 0.0
    %1177 = vmatpush.xpose.msra.mxu0 0.0
    %1178 = vmatpush.xpose.msra.mxu0 0.0
    %1179 = vmatpush.xpose.msra.mxu0 0.0
    %1180 = vmatpush.xpose.msra.mxu0 0.0
    %1181 = vmatpush.xpose.msra.mxu0 %v1164
    %1182 = vmatmul.f32.gmra.mxu0 %v1162
    %v1183 = vpop.f32.mrf.mxu0
    %v1184 = vadd.f32 %v104, %v1183
    %1185 = vdwg.mxu0
    %v1186 = vsel %vm211, %v1156, -inf
    %1187 = vmax.xlane.f32.xlu0 %v1186
    %v1188 = vpop.xlane.xlu0 %1187
    %v1189 = vsel %vm211, %v1184, -inf
    %1190 = vmax.xlane.f32.xlu0 %v1189
    %v1191 = vpop.xlane.xlu0 %1190
    %v1192 = vsub.f32 %v1156, %v1188
    %v1193 = vsub.f32 %v1184, %v1191
    %v1194 = vmul.f32 %v1192, 1.442695
    %v1195 = vpow.pop %v1194
    %v1196 = vmul.f32 %v1193, 1.442695
    %v1197 = vpow.pop %v1196
    %v1198 = vsel %vm211, %v1195, 0.0
    %1199 = vadd.xlane.f32.xlu0 %v1198
    %v1200 = vpop.xlane.xlu0 %1199
    %v1201 = vsel %vm211, %v1197, 0.0
    %1202 = vadd.xlane.f32.xlu0 %v1201
    %v1203 = vpop.xlane.xlu0 %1202
    %v1204 = vrcp.pop %v1200
    %v1205 = vrcp.pop %v1203
    %v1206 = vmul.f32 %v1195, %v1204
    %v1207 = vmul.f32 %v1197, %v1205
    %1208 = vrot.lane.b32.xlu0 %v1123, 64
    %v1209 = vpop.permute.xlu0 %1208
    %v1212 = vsel %vm211, %v1206, 0
    %1214 = vmatpush.msra.mxu0 0.0
    %1215 = vmatpush.msra.mxu0 0.0
    %1216 = vmatpush.msra.mxu0 0.0
    %1217 = vmatpush.msra.mxu0 0.0
    %1218 = vmatpush.msra.mxu0 0.0
    %1219 = vmatpush.msra.mxu0 0.0
    %1220 = vmatpush.msra.mxu0 0.0
    %1221 = vmatpush.msra.mxu0 0.0
    %1222 = vmatpush.msra.mxu0 0.0
    %1223 = vmatpush.msra.mxu0 0.0
    %1224 = vmatpush.msra.mxu0 0.0
    %1225 = vmatpush.msra.mxu0 0.0
    %1226 = vmatpush.msra.mxu0 0.0
    %1227 = vmatpush.msra.mxu0 0.0
    %1228 = vmatpush.msra.mxu0 0.0
    %1229 = vmatpush.msra.mxu0 %v1209
    %1230 = vmatmul.f32.gmra.mxu0 %v1212
    %v1231 = vpop.f32.mrf.mxu0
    %v1232 = vadd.f32 0.0, %v1231
    %1233 = vdwg.mxu0
    %1234 = vrot.lane.b32.xlu0 %v1126, 64
    %v1235 = vpop.permute.xlu0 %1234
    %v1238 = vsel %vm211, %v1207, 0
    %1240 = vmatpush.msra.mxu0 0.0
    %1241 = vmatpush.msra.mxu0 0.0
    %1242 = vmatpush.msra.mxu0 0.0
    %1243 = vmatpush.msra.mxu0 0.0
    %1244 = vmatpush.msra.mxu0 0.0
    %1245 = vmatpush.msra.mxu0 0.0
    %1246 = vmatpush.msra.mxu0 0.0
    %1247 = vmatpush.msra.mxu0 0.0
    %1248 = vmatpush.msra.mxu0 0.0
    %1249 = vmatpush.msra.mxu0 0.0
    %1250 = vmatpush.msra.mxu0 0.0
    %1251 = vmatpush.msra.mxu0 0.0
    %1252 = vmatpush.msra.mxu0 0.0
    %1253 = vmatpush.msra.mxu0 0.0
    %1254 = vmatpush.msra.mxu0 0.0
    %1255 = vmatpush.msra.mxu0 %v1235
    %1256 = vmatmul.f32.gmra.mxu0 %v1238
    %v1257 = vpop.f32.mrf.mxu0
    %v1258 = vadd.f32 0.0, %v1257
    %1259 = vdwg.mxu0
    %1260 = vst.msk [vmem:[#allocation2] sm:$0xff] %vm211, %v1232
    %1261 = vst.msk [vmem:[#allocation2 + $0x8] sm:$0xff] %vm211, %v1258
    %1262 = vrot.lane.b32.xlu0 %v1128, 120
    %v1263 = vpop.permute.xlu0 %1262
    %1264 = vrot.lane.b32.xlu0 %v1123, 88
    %v1265 = vpop.permute.xlu0 %1264
    %v1266 = vsel %vm211, %v1263, 0
    %v1268 = vsel %vm211, %v1265, 0
    %1270 = vmatpush.xpose.msra.mxu0 0.0
    %1271 = vmatpush.xpose.msra.mxu0 0.0
    %1272 = vmatpush.xpose.msra.mxu0 0.0
    %1273 = vmatpush.xpose.msra.mxu0 0.0
    %1274 = vmatpush.xpose.msra.mxu0 0.0
    %1275 = vmatpush.xpose.msra.mxu0 0.0
    %1276 = vmatpush.xpose.msra.mxu0 0.0
    %1277 = vmatpush.xpose.msra.mxu0 0.0
    %1278 = vmatpush.xpose.msra.mxu0 0.0
    %1279 = vmatpush.xpose.msra.mxu0 0.0
    %1280 = vmatpush.xpose.msra.mxu0 0.0
    %1281 = vmatpush.xpose.msra.mxu0 0.0
    %1282 = vmatpush.xpose.msra.mxu0 0.0
    %1283 = vmatpush.xpose.msra.mxu0 0.0
    %1284 = vmatpush.xpose.msra.mxu0 0.0
    %1285 = vmatpush.xpose.msra.mxu0 %v1268
    %1286 = vmatmul.f32.gmra.mxu0 %v1266
    %v1287 = vpop.f32.mrf.mxu0
    %v1288 = vadd.f32 %v104, %v1287
    %1289 = vdwg.mxu0
    %1290 = vrot.lane.b32.xlu0 %v1129, 120
    %v1291 = vpop.permute.xlu0 %1290
    %1292 = vrot.lane.b32.xlu0 %v1126, 88
    %v1293 = vpop.permute.xlu0 %1292
    %v1294 = vsel %vm211, %v1291, 0
    %v1296 = vsel %vm211, %v1293, 0
    %1298 = vmatpush.xpose.msra.mxu0 0.0
    %1299 = vmatpush.xpose.msra.mxu0 0.0
    %1300 = vmatpush.xpose.msra.mxu0 0.0
    %1301 = vmatpush.xpose.msra.mxu0 0.0
    %1302 = vmatpush.xpose.msra.mxu0 0.0
    %1303 = vmatpush.xpose.msra.mxu0 0.0
    %1304 = vmatpush.xpose.msra.mxu0 0.0
    %1305 = vmatpush.xpose.msra.mxu0 0.0
    %1306 = vmatpush.xpose.msra.mxu0 0.0
    %1307 = vmatpush.xpose.msra.mxu0 0.0
    %1308 = vmatpush.xpose.msra.mxu0 0.0
    %1309 = vmatpush.xpose.msra.mxu0 0.0
    %1310 = vmatpush.xpose.msra.mxu0 0.0
    %1311 = vmatpush.xpose.msra.mxu0 0.0
    %1312 = vmatpush.xpose.msra.mxu0 0.0
    %1313 = vmatpush.xpose.msra.mxu0 %v1296
    %1314 = vmatmul.f32.gmra.mxu0 %v1294
    %v1315 = vpop.f32.mrf.mxu0
    %v1316 = vadd.f32 %v104, %v1315
    %1317 = vdwg.mxu0
    %v1318 = vsel %vm211, %v1288, -inf
    %1319 = vmax.xlane.f32.xlu0 %v1318
    %v1320 = vpop.xlane.xlu0 %1319
    %v1321 = vsel %vm211, %v1316, -inf
    %1322 = vmax.xlane.f32.xlu0 %v1321
    %v1323 = vpop.xlane.xlu0 %1322
    %v1324 = vsub.f32 %v1288, %v1320
    %v1325 = vsub.f32 %v1316, %v1323
    %v1326 = vmul.f32 %v1324, 1.442695
    %v1327 = vpow.pop %v1326
    %v1328 = vmul.f32 %v1325, 1.442695
    %v1329 = vpow.pop %v1328
    %v1330 = vsel %vm211, %v1327, 0.0
    %1331 = vadd.xlane.f32.xlu0 %v1330
    %v1332 = vpop.xlane.xlu0 %1331
    %v1333 = vsel %vm211, %v1329, 0.0
    %1334 = vadd.xlane.f32.xlu0 %v1333
    %v1335 = vpop.xlane.xlu0 %1334
    %v1336 = vrcp.pop %v1332
    %v1337 = vrcp.pop %v1335
    %v1338 = vmul.f32 %v1327, %v1336
    %v1339 = vmul.f32 %v1329, %v1337
    %1340 = vrot.lane.b32.xlu0 %v1123, 56
    %v1341 = vpop.permute.xlu0 %1340
    %v1344 = vsel %vm211, %v1338, 0
    %1346 = vmatpush.msra.mxu0 0.0
    %1347 = vmatpush.msra.mxu0 0.0
    %1348 = vmatpush.msra.mxu0 0.0
    %1349 = vmatpush.msra.mxu0 0.0
    %1350 = vmatpush.msra.mxu0 0.0
    %1351 = vmatpush.msra.mxu0 0.0
    %1352 = vmatpush.msra.mxu0 0.0
    %1353 = vmatpush.msra.mxu0 0.0
    %1354 = vmatpush.msra.mxu0 0.0
    %1355 = vmatpush.msra.mxu0 0.0
    %1356 = vmatpush.msra.mxu0 0.0
    %1357 = vmatpush.msra.mxu0 0.0
    %1358 = vmatpush.msra.mxu0 0.0
    %1359 = vmatpush.msra.mxu0 0.0
    %1360 = vmatpush.msra.mxu0 0.0
    %1361 = vmatpush.msra.mxu0 %v1341
    %1362 = vmatmul.f32.gmra.mxu0 %v1344
    %v1363 = vpop.f32.mrf.mxu0
    %v1364 = vadd.f32 0.0, %v1363
    %1365 = vdwg.mxu0
    %1366 = vrot.lane.b32.xlu0 %v1126, 56
    %v1367 = vpop.permute.xlu0 %1366
    %v1370 = vsel %vm211, %v1339, 0
    %1372 = vmatpush.msra.mxu0 0.0
    %1373 = vmatpush.msra.mxu0 0.0
    %1374 = vmatpush.msra.mxu0 0.0
    %1375 = vmatpush.msra.mxu0 0.0
    %1376 = vmatpush.msra.mxu0 0.0
    %1377 = vmatpush.msra.mxu0 0.0
    %1378 = vmatpush.msra.mxu0 0.0
    %1379 = vmatpush.msra.mxu0 0.0
    %1380 = vmatpush.msra.mxu0 0.0
    %1381 = vmatpush.msra.mxu0 0.0
    %1382 = vmatpush.msra.mxu0 0.0
    %1383 = vmatpush.msra.mxu0 0.0
    %1384 = vmatpush.msra.mxu0 0.0
    %1385 = vmatpush.msra.mxu0 0.0
    %1386 = vmatpush.msra.mxu0 0.0
    %1387 = vmatpush.msra.mxu0 %v1367
    %1388 = vmatmul.f32.gmra.mxu0 %v1370
    %v1389 = vpop.f32.mrf.mxu0
    %v1390 = vadd.f32 0.0, %v1389
    %1391 = vdwg.mxu0
    %1394 = vrot.lane.b32.xlu0 %v1364, 8
    %v1395 = vpop.permute.xlu0 %1394
    %1396 = vrot.lane.b32.xlu0 %v1390, 8
    %v1397 = vpop.permute.xlu0 %1396
    %1400 = vst.msk [vmem:[#allocation2] sm:$0xff] %vm479, %v1395
    %1401 = vst.msk [vmem:[#allocation2 + $0x8] sm:$0xff] %vm479, %v1397
    %1402 = vrot.lane.b32.xlu0 %v1128, 112
    %v1403 = vpop.permute.xlu0 %1402
    %1404 = vrot.lane.b32.xlu0 %v1123, 80
    %v1405 = vpop.permute.xlu0 %1404
    %v1406 = vsel %vm211, %v1403, 0
    %v1408 = vsel %vm211, %v1405, 0
    %1410 = vmatpush.xpose.msra.mxu0 0.0
    %1411 = vmatpush.xpose.msra.mxu0 0.0
    %1412 = vmatpush.xpose.msra.mxu0 0.0
    %1413 = vmatpush.xpose.msra.mxu0 0.0
    %1414 = vmatpush.xpose.msra.mxu0 0.0
    %1415 = vmatpush.xpose.msra.mxu0 0.0
    %1416 = vmatpush.xpose.msra.mxu0 0.0
    %1417 = vmatpush.xpose.msra.mxu0 0.0
    %1418 = vmatpush.xpose.msra.mxu0 0.0
    %1419 = vmatpush.xpose.msra.mxu0 0.0
    %1420 = vmatpush.xpose.msra.mxu0 0.0
    %1421 = vmatpush.xpose.msra.mxu0 0.0
    %1422 = vmatpush.xpose.msra.mxu0 0.0
    %1423 = vmatpush.xpose.msra.mxu0 0.0
    %1424 = vmatpush.xpose.msra.mxu0 0.0
    %1425 = vmatpush.xpose.msra.mxu0 %v1408
    %1426 = vmatmul.f32.gmra.mxu0 %v1406
    %v1427 = vpop.f32.mrf.mxu0
    %v1428 = vadd.f32 %v104, %v1427
    %1429 = vdwg.mxu0
    %1430 = vrot.lane.b32.xlu0 %v1129, 112
    %v1431 = vpop.permute.xlu0 %1430
    %1432 = vrot.lane.b32.xlu0 %v1126, 80
    %v1433 = vpop.permute.xlu0 %1432
    %v1434 = vsel %vm211, %v1431, 0
    %v1436 = vsel %vm211, %v1433, 0
    %1438 = vmatpush.xpose.msra.mxu0 0.0
    %1439 = vmatpush.xpose.msra.mxu0 0.0
    %1440 = vmatpush.xpose.msra.mxu0 0.0
    %1441 = vmatpush.xpose.msra.mxu0 0.0
    %1442 = vmatpush.xpose.msra.mxu0 0.0
    %1443 = vmatpush.xpose.msra.mxu0 0.0
    %1444 = vmatpush.xpose.msra.mxu0 0.0
    %1445 = vmatpush.xpose.msra.mxu0 0.0
    %1446 = vmatpush.xpose.msra.mxu0 0.0
    %1447 = vmatpush.xpose.msra.mxu0 0.0
    %1448 = vmatpush.xpose.msra.mxu0 0.0
    %1449 = vmatpush.xpose.msra.mxu0 0.0
    %1450 = vmatpush.xpose.msra.mxu0 0.0
    %1451 = vmatpush.xpose.msra.mxu0 0.0
    %1452 = vmatpush.xpose.msra.mxu0 0.0
    %1453 = vmatpush.xpose.msra.mxu0 %v1436
    %1454 = vmatmul.f32.gmra.mxu0 %v1434
    %v1455 = vpop.f32.mrf.mxu0
    %v1456 = vadd.f32 %v104, %v1455
    %1457 = vdwg.mxu0
    %v1458 = vsel %vm211, %v1428, -inf
    %1459 = vmax.xlane.f32.xlu0 %v1458
    %v1460 = vpop.xlane.xlu0 %1459
    %v1461 = vsel %vm211, %v1456, -inf
    %1462 = vmax.xlane.f32.xlu0 %v1461
    %v1463 = vpop.xlane.xlu0 %1462
    %v1464 = vsub.f32 %v1428, %v1460
    %v1465 = vsub.f32 %v1456, %v1463
    %v1466 = vmul.f32 %v1464, 1.442695
    %v1467 = vpow.pop %v1466
    %v1468 = vmul.f32 %v1465, 1.442695
    %v1469 = vpow.pop %v1468
    %v1470 = vsel %vm211, %v1467, 0.0
    %1471 = vadd.xlane.f32.xlu0 %v1470
    %v1472 = vpop.xlane.xlu0 %1471
    %v1473 = vsel %vm211, %v1469, 0.0
    %1474 = vadd.xlane.f32.xlu0 %v1473
    %v1475 = vpop.xlane.xlu0 %1474
    %v1476 = vrcp.pop %v1472
    %v1477 = vrcp.pop %v1475
    %v1478 = vmul.f32 %v1467, %v1476
    %v1479 = vmul.f32 %v1469, %v1477
    %1480 = vrot.lane.b32.xlu0 %v1123, 48
    %v1481 = vpop.permute.xlu0 %1480
    %v1484 = vsel %vm211, %v1478, 0
    %1486 = vmatpush.msra.mxu0 0.0
    %1487 = vmatpush.msra.mxu0 0.0
    %1488 = vmatpush.msra.mxu0 0.0
    %1489 = vmatpush.msra.mxu0 0.0
    %1490 = vmatpush.msra.mxu0 0.0
    %1491 = vmatpush.msra.mxu0 0.0
    %1492 = vmatpush.msra.mxu0 0.0
    %1493 = vmatpush.msra.mxu0 0.0
    %1494 = vmatpush.msra.mxu0 0.0
    %1495 = vmatpush.msra.mxu0 0.0
    %1496 = vmatpush.msra.mxu0 0.0
    %1497 = vmatpush.msra.mxu0 0.0
    %1498 = vmatpush.msra.mxu0 0.0
    %1499 = vmatpush.msra.mxu0 0.0
    %1500 = vmatpush.msra.mxu0 0.0
    %1501 = vmatpush.msra.mxu0 %v1481
    %1502 = vmatmul.f32.gmra.mxu0 %v1484
    %v1503 = vpop.f32.mrf.mxu0
    %v1504 = vadd.f32 0.0, %v1503
    %1505 = vdwg.mxu0
    %1506 = vrot.lane.b32.xlu0 %v1126, 48
    %v1507 = vpop.permute.xlu0 %1506
    %v1510 = vsel %vm211, %v1479, 0
    %1512 = vmatpush.msra.mxu0 0.0
    %1513 = vmatpush.msra.mxu0 0.0
    %1514 = vmatpush.msra.mxu0 0.0
    %1515 = vmatpush.msra.mxu0 0.0
    %1516 = vmatpush.msra.mxu0 0.0
    %1517 = vmatpush.msra.mxu0 0.0
    %1518 = vmatpush.msra.mxu0 0.0
    %1519 = vmatpush.msra.mxu0 0.0
    %1520 = vmatpush.msra.mxu0 0.0
    %1521 = vmatpush.msra.mxu0 0.0
    %1522 = vmatpush.msra.mxu0 0.0
    %1523 = vmatpush.msra.mxu0 0.0
    %1524 = vmatpush.msra.mxu0 0.0
    %1525 = vmatpush.msra.mxu0 0.0
    %1526 = vmatpush.msra.mxu0 0.0
    %1527 = vmatpush.msra.mxu0 %v1507
    %1528 = vmatmul.f32.gmra.mxu0 %v1510
    %v1529 = vpop.f32.mrf.mxu0
    %v1530 = vadd.f32 0.0, %v1529
    %1531 = vdwg.mxu0
    %1534 = vrot.lane.b32.xlu0 %v1504, 16
    %v1535 = vpop.permute.xlu0 %1534
    %1536 = vrot.lane.b32.xlu0 %v1530, 16
    %v1537 = vpop.permute.xlu0 %1536
    %1540 = vst.msk [vmem:[#allocation2] sm:$0xff] %vm620, %v1535
    %1541 = vst.msk [vmem:[#allocation2 + $0x8] sm:$0xff] %vm620, %v1537
    %1542 = vrot.lane.b32.xlu0 %v1128, 104
    %v1543 = vpop.permute.xlu0 %1542
    %1544 = vrot.lane.b32.xlu0 %v1123, 72
    %v1545 = vpop.permute.xlu0 %1544
    %v1546 = vsel %vm211, %v1543, 0
    %v1548 = vsel %vm211, %v1545, 0
    %1550 = vmatpush.xpose.msra.mxu0 0.0
    %1551 = vmatpush.xpose.msra.mxu0 0.0
    %1552 = vmatpush.xpose.msra.mxu0 0.0
    %1553 = vmatpush.xpose.msra.mxu0 0.0
    %1554 = vmatpush.xpose.msra.mxu0 0.0
    %1555 = vmatpush.xpose.msra.mxu0 0.0
    %1556 = vmatpush.xpose.msra.mxu0 0.0
    %1557 = vmatpush.xpose.msra.mxu0 0.0
    %1558 = vmatpush.xpose.msra.mxu0 0.0
    %1559 = vmatpush.xpose.msra.mxu0 0.0
    %1560 = vmatpush.xpose.msra.mxu0 0.0
    %1561 = vmatpush.xpose.msra.mxu0 0.0
    %1562 = vmatpush.xpose.msra.mxu0 0.0
    %1563 = vmatpush.xpose.msra.mxu0 0.0
    %1564 = vmatpush.xpose.msra.mxu0 0.0
    %1565 = vmatpush.xpose.msra.mxu0 %v1548
    %1566 = vmatmul.f32.gmra.mxu0 %v1546
    %v1567 = vpop.f32.mrf.mxu0
    %v1568 = vadd.f32 %v104, %v1567
    %1569 = vdwg.mxu0
    %1570 = vrot.lane.b32.xlu0 %v1129, 104
    %v1571 = vpop.permute.xlu0 %1570
    %1572 = vrot.lane.b32.xlu0 %v1126, 72
    %v1573 = vpop.permute.xlu0 %1572
    %v1574 = vsel %vm211, %v1571, 0
    %v1576 = vsel %vm211, %v1573, 0
    %1578 = vmatpush.xpose.msra.mxu0 0.0
    %1579 = vmatpush.xpose.msra.mxu0 0.0
    %1580 = vmatpush.xpose.msra.mxu0 0.0
    %1581 = vmatpush.xpose.msra.mxu0 0.0
    %1582 = vmatpush.xpose.msra.mxu0 0.0
    %1583 = vmatpush.xpose.msra.mxu0 0.0
    %1584 = vmatpush.xpose.msra.mxu0 0.0
    %1585 = vmatpush.xpose.msra.mxu0 0.0
    %1586 = vmatpush.xpose.msra.mxu0 0.0
    %1587 = vmatpush.xpose.msra.mxu0 0.0
    %1588 = vmatpush.xpose.msra.mxu0 0.0
    %1589 = vmatpush.xpose.msra.mxu0 0.0
    %1590 = vmatpush.xpose.msra.mxu0 0.0
    %1591 = vmatpush.xpose.msra.mxu0 0.0
    %1592 = vmatpush.xpose.msra.mxu0 0.0
    %1593 = vmatpush.xpose.msra.mxu0 %v1576
    %1594 = vmatmul.f32.gmra.mxu0 %v1574
    %v1595 = vpop.f32.mrf.mxu0
    %v1596 = vadd.f32 %v104, %v1595
    %1597 = vdwg.mxu0
    %v1598 = vsel %vm211, %v1568, -inf
    %1599 = vmax.xlane.f32.xlu0 %v1598
    %v1600 = vpop.xlane.xlu0 %1599
    %v1601 = vsel %vm211, %v1596, -inf
    %1602 = vmax.xlane.f32.xlu0 %v1601
    %v1603 = vpop.xlane.xlu0 %1602
    %v1604 = vsub.f32 %v1568, %v1600
    %v1605 = vsub.f32 %v1596, %v1603
    %v1606 = vmul.f32 %v1604, 1.442695
    %v1607 = vpow.pop %v1606
    %v1608 = vmul.f32 %v1605, 1.442695
    %v1609 = vpow.pop %v1608
    %v1610 = vsel %vm211, %v1607, 0.0
    %1611 = vadd.xlane.f32.xlu0 %v1610
    %v1612 = vpop.xlane.xlu0 %1611
    %v1613 = vsel %vm211, %v1609, 0.0
    %1614 = vadd.xlane.f32.xlu0 %v1613
    %v1615 = vpop.xlane.xlu0 %1614
    %v1616 = vrcp.pop %v1612
    %v1617 = vrcp.pop %v1615
    %v1618 = vmul.f32 %v1607, %v1616
    %v1619 = vmul.f32 %v1609, %v1617
    %1620 = vrot.lane.b32.xlu0 %v1123, 40
    %v1621 = vpop.permute.xlu0 %1620
    %v1624 = vsel %vm211, %v1618, 0
    %1626 = vmatpush.msra.mxu0 0.0
    %1627 = vmatpush.msra.mxu0 0.0
    %1628 = vmatpush.msra.mxu0 0.0
    %1629 = vmatpush.msra.mxu0 0.0
    %1630 = vmatpush.msra.mxu0 0.0
    %1631 = vmatpush.msra.mxu0 0.0
    %1632 = vmatpush.msra.mxu0 0.0
    %1633 = vmatpush.msra.mxu0 0.0
    %1634 = vmatpush.msra.mxu0 0.0
    %1635 = vmatpush.msra.mxu0 0.0
    %1636 = vmatpush.msra.mxu0 0.0
    %1637 = vmatpush.msra.mxu0 0.0
    %1638 = vmatpush.msra.mxu0 0.0
    %1639 = vmatpush.msra.mxu0 0.0
    %1640 = vmatpush.msra.mxu0 0.0
    %1641 = vmatpush.msra.mxu0 %v1621
    %1642 = vmatmul.f32.gmra.mxu0 %v1624
    %v1643 = vpop.f32.mrf.mxu0
    %v1644 = vadd.f32 0.0, %v1643
    %1645 = vdwg.mxu0
    %1646 = vrot.lane.b32.xlu0 %v1126, 40
    %v1647 = vpop.permute.xlu0 %1646
    %v1650 = vsel %vm211, %v1619, 0
    %1652 = vmatpush.msra.mxu0 0.0
    %1653 = vmatpush.msra.mxu0 0.0
    %1654 = vmatpush.msra.mxu0 0.0
    %1655 = vmatpush.msra.mxu0 0.0
    %1656 = vmatpush.msra.mxu0 0.0
    %1657 = vmatpush.msra.mxu0 0.0
    %1658 = vmatpush.msra.mxu0 0.0
    %1659 = vmatpush.msra.mxu0 0.0
    %1660 = vmatpush.msra.mxu0 0.0
    %1661 = vmatpush.msra.mxu0 0.0
    %1662 = vmatpush.msra.mxu0 0.0
    %1663 = vmatpush.msra.mxu0 0.0
    %1664 = vmatpush.msra.mxu0 0.0
    %1665 = vmatpush.msra.mxu0 0.0
    %1666 = vmatpush.msra.mxu0 0.0
    %1667 = vmatpush.msra.mxu0 %v1647
    %1668 = vmatmul.f32.gmra.mxu0 %v1650
    %v1669 = vpop.f32.mrf.mxu0
    %v1670 = vadd.f32 0.0, %v1669
    %1671 = vdwg.mxu0
    %1674 = vrot.lane.b32.xlu0 %v1644, 24
    %v1675 = vpop.permute.xlu0 %1674
    %1676 = vrot.lane.b32.xlu0 %v1670, 24
    %v1677 = vpop.permute.xlu0 %1676
    %1680 = vst.msk [vmem:[#allocation2] sm:$0xff] %vm761, %v1675
    %1681 = vst.msk [vmem:[#allocation2 + $0x8] sm:$0xff] %vm761, %v1677
    %v1682 = vld [vmem:[#allocation2] sm:$0xff]
    %v1683 = vld [vmem:[#allocation2 + $0x8] sm:$0xff]
    %s1684 = scalar_lea.vmem %s7, 32
    %v1685 = vld [vmem:[%s1684] sm:$0xff]
    %v1686 = vld [vmem:[%s1684 + $0x8] sm:$0xff]
    %v1687 = vld [vmem:[%s1684 + $0x10] sm:$0xff]
    %v1688 = vld [vmem:[%s1684 + $0x18] sm:$0xff]
    %s1689 = scalar_lea.vmem %s8, 1
    %v1690 = vld [vmem:[%s1689] sm:$0x1]
    %v1692 = vperm.slane %v1690, 0
    %v1695 = vsel %vm107, %v1682, 0
    %v1698 = vsel %vm107, %v1683, 0
    %1700 = vmatpush.msra.mxu0 0.0
    %1701 = vmatpush.msra.mxu0 0.0
    %1702 = vmatpush.msra.mxu0 0.0
    %1703 = vmatpush.msra.mxu0 0.0
    %1704 = vmatpush.msra.mxu0 0.0
    %1705 = vmatpush.msra.mxu0 0.0
    %1706 = vmatpush.msra.mxu0 0.0
    %1707 = vmatpush.msra.mxu0 0.0
    %1708 = vmatpush.msra.mxu0 0.0
    %1709 = vmatpush.msra.mxu0 0.0
    %1710 = vmatpush.msra.mxu0 0.0
    %1711 = vmatpush.msra.mxu0 0.0
    %1712 = vmatpush.msra.mxu0 %v1688
    %1713 = vmatpush.msra.mxu0 %v1687
    %1714 = vmatpush.msra.mxu0 %v1686
    %1715 = vmatpush.msra.mxu0 %v1685
    %1716 = vmatmul.f32.gmra.mxu0 %v1695
    %v1717 = vpop.f32.mrf.mxu0
    %v1718 = vadd.f32 %v1692, %v1717
    %1719 = vmatmul.f32.gmra.mxu0 %v1698
    %v1720 = vpop.f32.mrf.mxu0
    %v1721 = vadd.f32 %v1692, %v1720
    %1722 = vdwg.mxu0
    %v1723 = vadd.f32 %v1029, %v1718
    %v1724 = vadd.f32 %v1030, %v1721
    %s1725 = scalar_lea.vmem %s9, 1
    %v1726 = vld [vmem:[%s1725] sm:$0x1]
    %s1727 = scalar_lea.vmem %s10, 1
    %v1728 = vld [vmem:[%s1727] sm:$0x1]
    %v1729 = vsel %vm107, %v1723, 0.0
    %1730 = vadd.xlane.f32.xlu0 %v1729
    %v1731 = vpop.xlane.xlu0 %1730
    %v1732 = vsel %vm107, %v1724, 0.0
    %1733 = vadd.xlane.f32.xlu0 %v1732
    %v1734 = vpop.xlane.xlu0 %1733
    %v1735 = vmul.f32 %v1731, %v120
    %v1736 = vmul.f32 %v1734, %v120
    %v1737 = vsub.f32 %v1723, %v1735
    %v1738 = vsub.f32 %v1724, %v1736
    %v1739 = vmul.f32 %v1737, %v1737
    %v1740 = vmul.f32 %v1738, %v1738
    %v1741 = vsel %vm107, %v1739, 0.0
    %1742 = vadd.xlane.f32.xlu0 %v1741
    %v1743 = vpop.xlane.xlu0 %1742
    %v1744 = vsel %vm107, %v1740, 0.0
    %1745 = vadd.xlane.f32.xlu0 %v1744
    %v1746 = vpop.xlane.xlu0 %1745
    %v1747 = vmul.f32 %v1743, %v120
    %v1748 = vmul.f32 %v1746, %v120
    %v1749 = vadd.f32 %v1747, 1e-05
    %v1750 = vadd.f32 %v1748, 1e-05
    %v1751 = vrsqrt.pop %v1749
    %v1752 = vmul.f32 %v1751, %v1749
    %v1753 = vmul.f32 %v1752, %v1751
    %v1754 = vmul.f32 0.5, %v1753
    %v1755 = vsub.f32 1.5, %v1754
    %v1756 = vmul.f32 %v1751, %v1755
    %vm1757 = vweird.f32 %v1749
    %vm1758 = vweird.f32 %v1751
    %vm1759 = vmor %vm1757, %vm1758
    %v1760 = vsel %vm1759, %v1751, %v1756
    %v1761 = vrsqrt.pop %v1750
    %v1762 = vmul.f32 %v1761, %v1750
    %v1763 = vmul.f32 %v1762, %v1761
    %v1764 = vmul.f32 0.5, %v1763
    %v1765 = vsub.f32 1.5, %v1764
    %v1766 = vmul.f32 %v1761, %v1765
    %vm1767 = vweird.f32 %v1750
    %vm1768 = vweird.f32 %v1761
    %vm1769 = vmor %vm1767, %vm1768
    %v1770 = vsel %vm1769, %v1761, %v1766
    %v1771 = vmul.f32 %v1737, %v1760
    %v1772 = vmul.f32 %v1738, %v1770
    %v1774 = vperm.slane %v1726, 0
    %v1776 = vmul.f32 %v1771, %v1774
    %v1777 = vmul.f32 %v1772, %v1774
    %v1779 = vperm.slane %v1728, 0
    %v1781 = vadd.f32 %v1776, %v1779
    %v1782 = vadd.f32 %v1777, %v1779
    %s1783 = scalar_lea.vmem %s11, 32
    %v1784 = vld [vmem:[%s1783] sm:$0xff]
    %v1785 = vld [vmem:[%s1783 + $0x8] sm:$0xff]
    %v1786 = vld [vmem:[%s1783 + $0x10] sm:$0xff]
    %v1787 = vld [vmem:[%s1783 + $0x18] sm:$0xff]
    %s1788 = scalar_lea.vmem %s12, 1
    %v1789 = vld [vmem:[%s1788] sm:$0x1]
    %v1791 = vperm.slane %v1789, 0
    %v1794 = vsel %vm107, %v1781, 0
    %v1797 = vsel %vm107, %v1782, 0
    %1799 = vmatpush.msra.mxu0 0.0
    %1800 = vmatpush.msra.mxu0 0.0
    %1801 = vmatpush.msra.mxu0 0.0
    %1802 = vmatpush.msra.mxu0 0.0
    %1803 = vmatpush.msra.mxu0 0.0
    %1804 = vmatpush.msra.mxu0 0.0
    %1805 = vmatpush.msra.mxu0 0.0
    %1806 = vmatpush.msra.mxu0 0.0
    %1807 = vmatpush.msra.mxu0 0.0
    %1808 = vmatpush.msra.mxu0 0.0
    %1809 = vmatpush.msra.mxu0 0.0
    %1810 = vmatpush.msra.mxu0 0.0
    %1811 = vmatpush.msra.mxu0 %v1787
    %1812 = vmatpush.msra.mxu0 %v1786
    %1813 = vmatpush.msra.mxu0 %v1785
    %1814 = vmatpush.msra.mxu0 %v1784
    %1815 = vmatmul.f32.gmra.mxu0 %v1794
    %v1816 = vpop.f32.mrf.mxu0
    %v1817 = vadd.f32 %v1791, %v1816
    %1818 = vmatmul.f32.gmra.mxu0 %v1797
    %v1819 = vpop.f32.mrf.mxu0
    %v1820 = vadd.f32 %v1791, %v1819
    %1821 = vdwg.mxu0
    %v1822 = vmul.f32 %v1817, 0.5
    %v1823 = vmul.f32 %v1820, 0.5
    %v1824 = vmul.f32 %v1817, 0.70710677
    %v1825 = vmul.f32 %v1820, 0.70710677
    %v1826 = vmul.f32 %v1824, %v1824
    %v1827 = vmin.f32 16.0, %v1826
    %v1828 = vmul.f32 %v1827, 2.1237322e-06
    %v1829 = vadd.f32 %v1828, 0.00028619796
    %v1830 = vmul.f32 %v1827, %v1829
    %v1831 = vadd.f32 %v1830, 0.0036580483
    %v1832 = vmul.f32 %v1827, %v1831
    %v1833 = vadd.f32 %v1832, 0.05243302
    %v1834 = vmul.f32 %v1827, %v1833
    %v1835 = vadd.f32 %v1834, 0.18741608
    %v1836 = vmul.f32 %v1827, %v1835
    %v1837 = vadd.f32 %v1836, 1.1283791
    %v1838 = vmul.f32 %v1824, %v1837
    %v1839 = vmul.f32 %v1827, 3.8918573e-05
    %v1840 = vadd.f32 %v1839, 0.001143296
    %v1841 = vmul.f32 %v1827, %v1840
    %v1842 = vadd.f32 %v1841, 0.014752088
    %v1843 = vmul.f32 %v1827, %v1842
    %v1844 = vadd.f32 %v1843, 0.112945676
    %v1845 = vmul.f32 %v1827, %v1844
    %v1846 = vadd.f32 %v1845, 0.4994258
    %v1847 = vmul.f32 %v1827, %v1846
    %v1848 = vadd.f32 %v1847, 1.0
    %v1849 = vrcp.pop %v1848
    %v1850 = vmul.f32 %v1848, %v1849
    %v1851 = vsub.f32 1.0, %v1850
    %v1852 = vmul.f32 %v1849, %v1851
    %v1853 = vadd.f32 %v1849, %v1852
    %vm1854 = vweird.f32 %v1848
    %vm1855 = vweird.f32 %v1849
    %vm1856 = vmor %vm1854, %vm1855
    %v1857 = vsel %vm1856, %v1849, %v1853
    %v1858 = vand.u32 2147483647, %v1848
    %vm1859 = vcmp.eq.f32.partialorder %v1858, 8.507059e+37
    %v1860 = vand.u32 %v1848, 2147483648
    %v1861 = vor.u32 1.1754944e-38, %v1860
    %v1862 = vsel %vm1859, %v1861, %v1857
    %v1863 = vmul.f32 %v1838, %v1862
    %v1864 = vmin.f32 %v1863, 1.0
    %v1865 = vmax.f32 %v1864, -1.0
    %v1866 = vmul.f32 %v1825, %v1825
    %v1867 = vmin.f32 16.0, %v1866
    %v1868 = vmul.f32 %v1867, 2.1237322e-06
    %v1869 = vadd.f32 %v1868, 0.00028619796
    %v1870 = vmul.f32 %v1867, %v1869
    %v1871 = vadd.f32 %v1870, 0.0036580483
    %v1872 = vmul.f32 %v1867, %v1871
    %v1873 = vadd.f32 %v1872, 0.05243302
    %v1874 = vmul.f32 %v1867, %v1873
    %v1875 = vadd.f32 %v1874, 0.18741608
    %v1876 = vmul.f32 %v1867, %v1875
    %v1877 = vadd.f32 %v1876, 1.1283791
    %v1878 = vmul.f32 %v1825, %v1877
    %v1879 = vmul.f32 %v1867, 3.8918573e-05
    %v1880 = vadd.f32 %v1879, 0.001143296
    %v1881 = vmul.f32 %v1867, %v1880
    %v1882 = vadd.f32 %v1881, 0.014752088
    %v1883 = vmul.f32 %v1867, %v1882
    %v1884 = vadd.f32 %v1883, 0.112945676
    %v1885 = vmul.f32 %v1867, %v1884
    %v1886 = vadd.f32 %v1885, 0.4994258
    %v1887 = vmul.f32 %v1867, %v1886
    %v1888 = vadd.f32 %v1887, 1.0
    %v1889 = vrcp.pop %v1888
    %v1890 = vmul.f32 %v1888, %v1889
    %v1891 = vsub.f32 1.0, %v1890
    %v1892 = vmul.f32 %v1889, %v1891
    %v1893 = vadd.f32 %v1889, %v1892
    %vm1894 = vweird.f32 %v1888
    %vm1895 = vweird.f32 %v1889
    %vm1896 = vmor %vm1894, %vm1895
    %v1897 = vsel %vm1896, %v1889, %v1893
    %v1898 = vand.u32 2147483647, %v1888
    %vm1899 = vcmp.eq.f32.partialorder %v1898, 8.507059e+37
    %v1900 = vand.u32 %v1888, 2147483648
    %v1901 = vor.u32 1.1754944e-38, %v1900
    %v1902 = vsel %vm1899, %v1901, %v1897
    %v1903 = vmul.f32 %v1878, %v1902
    %v1904 = vmin.f32 %v1903, 1.0
    %v1905 = vmax.f32 %v1904, -1.0
    %v1906 = vadd.f32 %v1865, 1.0
    %v1907 = vadd.f32 %v1905, 1.0
    %v1908 = vmul.f32 %v1822, %v1906
    %v1909 = vmul.f32 %v1823, %v1907
    %s1910 = scalar_lea.vmem %s13, 128
    %v1911 = vld [vmem:[%s1910] sm:$0xff]
    %v1912 = vld [vmem:[%s1910 + $0x8] sm:$0xff]
    %v1913 = vld [vmem:[%s1910 + $0x10] sm:$0xff]
    %v1914 = vld [vmem:[%s1910 + $0x18] sm:$0xff]
    %v1915 = vld [vmem:[%s1910 + $0x20] sm:$0xff]
    %v1916 = vld [vmem:[%s1910 + $0x28] sm:$0xff]
    %v1917 = vld [vmem:[%s1910 + $0x30] sm:$0xff]
    %v1918 = vld [vmem:[%s1910 + $0x38] sm:$0xff]
    %v1919 = vld [vmem:[%s1910 + $0x40] sm:$0xff]
    %v1920 = vld [vmem:[%s1910 + $0x48] sm:$0xff]
    %v1921 = vld [vmem:[%s1910 + $0x50] sm:$0xff]
    %v1922 = vld [vmem:[%s1910 + $0x58] sm:$0xff]
    %v1923 = vld [vmem:[%s1910 + $0x60] sm:$0xff]
    %v1924 = vld [vmem:[%s1910 + $0x68] sm:$0xff]
    %v1925 = vld [vmem:[%s1910 + $0x70] sm:$0xff]
    %v1926 = vld [vmem:[%s1910 + $0x78] sm:$0xff]
    %s1927 = scalar_lea.vmem %s14, 1
    %v1928 = vld [vmem:[%s1927] sm:$0x1]
    %v1930 = vperm.slane %v1928, 0
    %1932 = vmatpush.msra.mxu0 %v1926
    %1933 = vmatpush.msra.mxu0 %v1925
    %1934 = vmatpush.msra.mxu0 %v1924
    %1935 = vmatpush.msra.mxu0 %v1923
    %1936 = vmatpush.msra.mxu0 %v1922
    %1937 = vmatpush.msra.mxu0 %v1921
    %1938 = vmatpush.msra.mxu0 %v1920
    %1939 = vmatpush.msra.mxu0 %v1919
    %1940 = vmatpush.msra.mxu0 %v1918
    %1941 = vmatpush.msra.mxu0 %v1917
    %1942 = vmatpush.msra.mxu0 %v1916
    %1943 = vmatpush.msra.mxu0 %v1915
    %1944 = vmatpush.msra.mxu0 %v1914
    %1945 = vmatpush.msra.mxu0 %v1913
    %1946 = vmatpush.msra.mxu0 %v1912
    %1947 = vmatpush.msra.mxu0 %v1911
    %1948 = vmatmul.f32.gmra.mxu0 %v1908
    %v1949 = vpop.f32.mrf.mxu0
    %v1950 = vadd.f32 %v1930, %v1949
    %1951 = vmatmul.f32.gmra.mxu0 %v1909
    %v1952 = vpop.f32.mrf.mxu0
    %v1953 = vadd.f32 %v1930, %v1952
    %1954 = vdwg.mxu0
    %v1955 = vadd.f32 %v1723, %v1950
    %v1956 = vadd.f32 %v1724, %v1953
    %v1957 = vld [vmem:[%s15] sm:$0x1]
    %v1958 = vld [vmem:[%s16] sm:$0x1]
    %v1959 = vsel %vm107, %v1955, 0.0
    %1960 = vadd.xlane.f32.xlu0 %v1959
    %v1961 = vpop.xlane.xlu0 %1960
    %v1962 = vsel %vm107, %v1956, 0.0
    %1963 = vadd.xlane.f32.xlu0 %v1962
    %v1964 = vpop.xlane.xlu0 %1963
    %v1965 = vmul.f32 %v1961, %v120
    %v1966 = vmul.f32 %v1964, %v120
    %v1967 = vsub.f32 %v1955, %v1965
    %v1968 = vsub.f32 %v1956, %v1966
    %v1969 = vmul.f32 %v1967, %v1967
    %v1970 = vmul.f32 %v1968, %v1968
    %v1971 = vsel %vm107, %v1969, 0.0
    %1972 = vadd.xlane.f32.xlu0 %v1971
    %v1973 = vpop.xlane.xlu0 %1972
    %v1974 = vsel %vm107, %v1970, 0.0
    %1975 = vadd.xlane.f32.xlu0 %v1974
    %v1976 = vpop.xlane.xlu0 %1975
    %v1977 = vmul.f32 %v1973, %v120
    %v1978 = vmul.f32 %v1976, %v120
    %v1979 = vadd.f32 %v1977, 1e-05
    %v1980 = vadd.f32 %v1978, 1e-05
    %v1981 = vrsqrt.pop %v1979
    %v1982 = vmul.f32 %v1981, %v1979
    %v1983 = vmul.f32 %v1982, %v1981
    %v1984 = vmul.f32 0.5, %v1983
    %v1985 = vsub.f32 1.5, %v1984
    %v1986 = vmul.f32 %v1981, %v1985
    %vm1987 = vweird.f32 %v1979
    %vm1988 = vweird.f32 %v1981
    %vm1989 = vmor %vm1987, %vm1988
    %v1990 = vsel %vm1989, %v1981, %v1986
    %v1991 = vrsqrt.pop %v1980
    %v1992 = vmul.f32 %v1991, %v1980
    %v1993 = vmul.f32 %v1992, %v1991
    %v1994 = vmul.f32 0.5, %v1993
    %v1995 = vsub.f32 1.5, %v1994
    %v1996 = vmul.f32 %v1991, %v1995
    %vm1997 = vweird.f32 %v1980
    %vm1998 = vweird.f32 %v1991
    %vm1999 = vmor %vm1997, %vm1998
    %v2000 = vsel %vm1999, %v1991, %v1996
    %v2001 = vmul.f32 %v1967, %v1990
    %v2002 = vmul.f32 %v1968, %v2000
    %v2004 = vperm.slane %v1957, 0
    %v2006 = vmul.f32 %v2001, %v2004
    %v2007 = vmul.f32 %v2002, %v2004
    %v2009 = vperm.slane %v1958, 0
    %v2011 = vadd.f32 %v2006, %v2009
    %v2012 = vadd.f32 %v2007, %v2009
    %2013 = vst.msk [vmem:[#allocation3] sm:$0xff] %vm107, %v2011
    %2014 = vst.msk [vmem:[#allocation3 + $0x8] sm:$0xff] %vm107, %v2012
    // Predicated region
    $region70: #{tpu_custom_call.1} parent=1 // pred_check
      _
    $region71: #{tpu_custom_call.1} parent=1 // pred_check_branch
      %2016 = sbr.rel (0) target = $region73
    $region72: #{tpu_custom_call.1} parent=1 // pred_region
      %2018 = vsyncadd [#allocation4], 0
      %s2019 = sshll.u32 [#allocation3], 4
      %s2020 = int_to_ptr.vmem [resolvable:$true] %s2019
      %s2021 = sshll.u32 %s17, 4
      %s2022 = int_to_ptr.hbm [resolvable:$true] %s2021
      %2027 = dma.vmem_to_hbm [thread:$0]  %s2020, 256, %s2022, [#allocation4], 128, 128, 8
    $region73: #{tpu_custom_call.1} parent=1 // pred_fallthru
      _
    // Predicated region
    $region74: #{tpu_custom_call.1} parent=1 // pred_check
      _
    $region75: #{tpu_custom_call.1} parent=1 // pred_check_branch
      %2029 = sbr.rel (0) target = $region77
    $region76: #{tpu_custom_call.1} parent=1 // pred_region
      %2031 = dma.done [#allocation4], 256
    $region77: #{tpu_custom_call.1} parent=1 // pred_fallthru
      _
    %2032 = vsyncpa [#allocation4], 1

</llo_original>
